<compile_context>
chip_gen: v6e
topology: v6e:2x2x1
jax: 0.10.0
libtpu: 0.0.40
codegen_flags: <defaults>
</compile_context>

<pallas_src>
import functools

import jax
import jax.numpy as jnp
from jax.experimental import pallas as pl
from jax.experimental.pallas import tpu as pltpu

LEAKY_SLOPE = 0.2
BN_EPS = 1e-5


# ---------------------------------------------------------------------------
# In-kernel helpers
# ---------------------------------------------------------------------------
def _bn_leaky(mains, gamma, beta, residuals=None):
    """Train-mode BatchNorm (fused scale/shift) + optional residual add + LeakyReLU(0.2).

    `mains` / `residuals` are Python lists of per-batch (rows, C) f32 values; statistics
    are taken over all valid rows of all batches (padding / junk rows never included).
    """
    n = float(sum(m.shape[0] for m in mains))
    mean = sum(jnp.sum(m, axis=0, keepdims=True) for m in mains) / n
    var = sum(jnp.sum((m - mean) ** 2, axis=0, keepdims=True) for m in mains) / n
    scale = gamma * jax.lax.rsqrt(var + BN_EPS)      # (1, C)
    shift = beta - mean * scale                      # (1, C)  (residual conv bias pre-folded)
    outs = []
    for i, m in enumerate(mains):
        y = m * scale + shift
        if residuals is not None:
            y = y + residuals[i]
        outs.append(jnp.where(y >= 0.0, y, LEAKY_SLOPE * y))
    return outs


def _text_encoder_kernel(x_ref,
                         w0_ref, g0_ref, be0_ref,
                         w1_ref, g1_ref, be1_ref,
                         w2_ref, g2_ref, be2_ref,
                         w3_ref, g3_ref, be3_ref,
                         o_ref,
                         s1_ref, s2_ref, s3_ref,
                         *, B, T, Cin, C):
    zrow = jnp.zeros((1, C), jnp.float32)

    # Zero only the conv "same"-padding rows (2 per batch segment), not the whole buffer.
    def zero_pad_rows(ref, L):
        seg = L + 2
        for b in range(B):
            ref[b * seg:b * seg + 1, :] = zrow
            ref[b * seg + L + 1:b * seg + L + 2, :] = zrow

    zero_pad_rows(s1_ref, T)
    zero_pad_rows(s2_ref, T // 2)
    zero_pad_rows(s3_ref, T // 4)

    # ---- project: Conv1d(k=3, s=1, p=1) + BN + LeakyReLU --------------------
    # ONE dot per tap over all batch segments; rows between segments are junk (ignored).
    seg0 = T + 2
    R0 = B * seg0 - 2
    acc0 = None
    for k in range(3):
        lhs = x_ref[k:k + R0, :]                         # (R0, Cin) shifted window
        wk = w0_ref[k * Cin:(k + 1) * Cin, :]            # (Cin, C)
        d = jnp.dot(lhs, wk, preferred_element_type=jnp.float32)
        acc0 = d if acc0 is None else acc0 + d
    # valid rows of batch b sit at [b*seg0, b*seg0 + T) inside the shifted result
    z0 = [acc0[b * seg0:b * seg0 + T, :] for b in range(B)]
    h0 = _bn_leaky(z0, g0_ref[...], be0_ref[...])
    for b in range(B):
        s1_ref[b * seg0 + 1:b * seg0 + 1 + T, :] = h0[b]

    # ---- down layers: Conv1d(k=4, s=2, p=1) + BN + residual Conv1d + LeakyReLU
    def down(src_ref, L, w_ref, g_ref, beta_ref, dst_ref, dst_seg, dst_off):
        Lo = L // 2
        # Padded row needed by (batch b, out t, tap k) is b*(L+2) + 2t + k = k + 2m with
        # m = b*(Lo+1) + t  ->  one strided load per tap covers every batch
        # (one junk row per batch boundary).
        M = B * (Lo + 1) - 1
        acc = None
        for k in range(4):
            lhs = src_ref[pl.ds(k, M, 2), :]             # (M, C) stride-2 sublane load
            wk = w_ref[k * C:(k + 1) * C, :]             # (C, 2C) = [main | residual]
            d = jnp.dot(lhs, wk, preferred_element_type=jnp.float32)
            acc = d if acc is None else acc + d
        mains = [acc[b * (Lo + 1):b * (Lo + 1) + Lo, :C] for b in range(B)]
        ress = [acc[b * (Lo + 1):b * (Lo + 1) + Lo, C:] for b in range(B)]
        h = _bn_leaky(mains, g_ref[...], beta_ref[...], ress)
        for b in range(B):
            r0 = b * dst_seg + dst_off
            dst_ref[r0:r0 + Lo, :] = h[b]

    down(s1_ref, T,      w1_ref, g1_ref, be1_ref, s2_ref, T // 2 + 2, 1)
    down(s2_ref, T // 2, w2_ref, g2_ref, be2_ref, s3_ref, T // 4 + 2, 1)
    down(s3_ref, T // 4, w3_ref, g3_ref, be3_ref, o_ref,  T // 8,     0)


# ---------------------------------------------------------------------------
# Wrapper: layout glue + single pallas_call
# ---------------------------------------------------------------------------
def _full_spec(shape):
    return pl.BlockSpec(shape, lambda i: (0,) * len(shape))


def text_encoder_forward(x_ncw, params):
    """x_ncw: (B, in_dim, T) -> (B, out_dim, T // 8), matching the PyTorch module."""
    B, Cin, T = x_ncw.shape
    C = params["project"]["w"].shape[-1]
    assert T % 8 == 0, "T must be divisible by 8 (three stride-2 downsamples)"

    # NCW -> channels-last + time padding by 1 (the only HBM-side glue, O(B*T*Cin)).
    h = jnp.transpose(x_ncw, (0, 2, 1))
    x2d = jnp.pad(h, ((0, 0), (1, 1), (0, 0))).reshape(B * (T + 2), Cin)

    p = params["project"]
    # Main conv bias p["b"]/d["b"] is exactly cancelled by train-mode BN -> not passed.
    args = [x2d, p["w"].reshape(3 * Cin, C), p["gamma"], p["beta"]]
    for i in range(1, 4):
        d = params[f"down_{i}"]
        w_merged = jnp.concatenate([d["w"], d["rw"]], axis=-1).reshape(4 * C, 2 * C)
        args += [w_merged, d["gamma"], d["beta"] + d["rb"]]   # residual bias folded into beta

    Tout = T // 8
    kernel = functools.partial(_text_encoder_kernel, B=B, T=T, Cin=Cin, C=C)

    flops = 2 * B * (T * (3 * Cin) * C
                     + (T // 2) * (4 * C) * (2 * C)
                     + (T // 4) * (4 * C) * (2 * C)
                     + (T // 8) * (4 * C) * (2 * C))
    bytes_accessed = 4 * (sum(int(a.size) for a in args) + B * Tout * C)

    out = pl.pallas_call(
        kernel,
        grid=(1,),
        in_specs=[_full_spec(a.shape) for a in args],
        out_specs=_full_spec((B * Tout, C)),
        out_shape=jax.ShapeDtypeStruct((B * Tout, C), jnp.float32),
        scratch_shapes=[
            pltpu.VMEM((B * (T + 2), C), jnp.float32),       # project output (padded)
            pltpu.VMEM((B * (T // 2 + 2), C), jnp.float32),  # down_1 output (padded)
            pltpu.VMEM((B * (T // 4 + 2), C), jnp.float32),  # down_2 output (padded)
        ],
        compiler_params=pltpu.CompilerParams(
            dimension_semantics=("arbitrary",),
            vmem_limit_bytes=32 * 1024 * 1024,
        ),
        cost_estimate=pl.CostEstimate(
            flops=flops, transcendentals=4 * C, bytes_accessed=bytes_accessed),
    )(*args)

    return jnp.transpose(out.reshape(B, Tout, C), (0, 2, 1))   # back to (B, C_out, T // 8)


# ---------------------------------------------------------------------------
# Parameter init (deterministic, mirrors _init_weights: xavier_uniform conv W,
# zero conv bias, BN weight=1 / bias=0)
# ---------------------------------------------------------------------------
def _xavier_uniform(key, ksize, cin, cout):
    fan_in, fan_out = cin * ksize, cout * ksize
    bound = (6.0 / (fan_in + fan_out)) ** 0.5
    # stored as (K, Cin, Cout) == transpose of torch (Cout, Cin, K)
    return jax.random.uniform(key, (ksize, cin, cout), jnp.float32, -bound, bound)


def init_text_encoder_params(key, in_dim, out_dim):
    ks = jax.random.split(key, 7)
    zeros = lambda: jnp.zeros((1, out_dim), jnp.float32)
    ones = lambda: jnp.ones((1, out_dim), jnp.float32)
    params = {
        "project": dict(w=_xavier_uniform(ks[0], 3, in_dim, out_dim),
                        b=zeros(),                 # kept for parity; no-op under train-mode BN
                        gamma=ones(), beta=zeros()),
    }
    for i in range(1, 4):
        params[f"down_{i}"] = dict(
            w=_xavier_uniform(ks[2 * i - 1], 4, out_dim, out_dim),
            b=zeros(), gamma=ones(), beta=zeros(),
            rw=_xavier_uniform(ks[2 * i], 4, out_dim, out_dim),
            rb=zeros())
    return params


# ---------------------------------------------------------------------------
if __name__ == "__main__":
    B, in_dim, out_dim, T = 2, 16, 32, 16
    num_residual_layers, num_residual_hiddens = 2, 32  # stored but unused in forward

    key = jax.random.PRNGKey(0)
    k_param, k_x = jax.random.split(key)
    params = init_text_encoder_params(k_param, in_dim, out_dim)
    x = jax.random.normal(k_x, (B, in_dim, T), jnp.float32)   # PyTorch NCW layout

    y = text_encoder_forward(x, params)
    y = jax.block_until_ready(y)

    assert y.shape == (B, out_dim, T // 8), y.shape
    assert bool(jnp.all(jnp.isfinite(y)))
    print("KERNEL_OK")
</pallas_src>

<mosaic_0001>
module attributes {stable_mosaic.version = 11 : i64} {
  func.func @_text_encoder_kernel(%arg0: i32, %arg1: memref<36x16xf32, #tpu.memory_space<vmem>>, %arg2: memref<48x32xf32, #tpu.memory_space<vmem>>, %arg3: memref<1x32xf32, #tpu.memory_space<vmem>>, %arg4: memref<1x32xf32, #tpu.memory_space<vmem>>, %arg5: memref<128x64xf32, #tpu.memory_space<vmem>>, %arg6: memref<1x32xf32, #tpu.memory_space<vmem>>, %arg7: memref<1x32xf32, #tpu.memory_space<vmem>>, %arg8: memref<128x64xf32, #tpu.memory_space<vmem>>, %arg9: memref<1x32xf32, #tpu.memory_space<vmem>>, %arg10: memref<1x32xf32, #tpu.memory_space<vmem>>, %arg11: memref<128x64xf32, #tpu.memory_space<vmem>>, %arg12: memref<1x32xf32, #tpu.memory_space<vmem>>, %arg13: memref<1x32xf32, #tpu.memory_space<vmem>>, %arg14: memref<4x32xf32, #tpu.memory_space<vmem>>, %arg15: memref<36x32xf32, #tpu.memory_space<vmem>>, %arg16: memref<20x32xf32, #tpu.memory_space<vmem>>, %arg17: memref<12x32xf32, #tpu.memory_space<vmem>>) attributes {dimension_semantics = [#tpu.dimension_semantics<arbitrary>], iteration_bounds = array<i64: 1>, scalar_prefetch = 0 : i64, scratch_operands = 3 : i64, tpu.core_type = #tpu.core_type<tc>, window_params = [{pipeline_mode = #tpu.pipeline_mode<synchronous>, transform_indices = @transform_0, window_bounds = array<i64: 36, 16>}, {pipeline_mode = #tpu.pipeline_mode<synchronous>, transform_indices = @transform_1, window_bounds = array<i64: 48, 32>}, {pipeline_mode = #tpu.pipeline_mode<synchronous>, transform_indices = @transform_2, window_bounds = array<i64: 1, 32>}, {pipeline_mode = #tpu.pipeline_mode<synchronous>, transform_indices = @transform_3, window_bounds = array<i64: 1, 32>}, {pipeline_mode = #tpu.pipeline_mode<synchronous>, transform_indices = @transform_4, window_bounds = array<i64: 128, 64>}, {pipeline_mode = #tpu.pipeline_mode<synchronous>, transform_indices = @transform_5, window_bounds = array<i64: 1, 32>}, {pipeline_mode = #tpu.pipeline_mode<synchronous>, transform_indices = @transform_6, window_bounds = array<i64: 1, 32>}, {pipeline_mode = #tpu.pipeline_mode<synchronous>, transform_indices = @transform_7, window_bounds = array<i64: 128, 64>}, {pipeline_mode = #tpu.pipeline_mode<synchronous>, transform_indices = @transform_8, window_bounds = array<i64: 1, 32>}, {pipeline_mode = #tpu.pipeline_mode<synchronous>, transform_indices = @transform_9, window_bounds = array<i64: 1, 32>}, {pipeline_mode = #tpu.pipeline_mode<synchronous>, transform_indices = @transform_10, window_bounds = array<i64: 128, 64>}, {pipeline_mode = #tpu.pipeline_mode<synchronous>, transform_indices = @transform_11, window_bounds = array<i64: 1, 32>}, {pipeline_mode = #tpu.pipeline_mode<synchronous>, transform_indices = @transform_12, window_bounds = array<i64: 1, 32>}, {pipeline_mode = #tpu.pipeline_mode<synchronous>, transform_indices = @transform_13, window_bounds = array<i64: 4, 32>}]} {
    %cst = arith.constant 0.000000e+00 : f32
    %0 = vector.broadcast %cst : f32 to vector<1x32xf32>
    %c0 = arith.constant 0 : index
    %c0_0 = arith.constant 0 : index
    %1 = vector.load %arg15[%c0, %c0_0] : memref<36x32xf32, #tpu.memory_space<vmem>>, vector<1x32xf32>
    tpu.vector_store %arg15[%c0, %c0_0], %0 {strides = array<i32>} : memref<36x32xf32, #tpu.memory_space<vmem>>, vector<1x32xf32>,
    %c17 = arith.constant 17 : index
    %c0_1 = arith.constant 0 : index
    %2 = vector.load %arg15[%c17, %c0_1] : memref<36x32xf32, #tpu.memory_space<vmem>>, vector<1x32xf32>
    tpu.vector_store %arg15[%c17, %c0_1], %0 {strides = array<i32>} : memref<36x32xf32, #tpu.memory_space<vmem>>, vector<1x32xf32>,
    %c18 = arith.constant 18 : index
    %c0_2 = arith.constant 0 : index
    %3 = vector.load %arg15[%c18, %c0_2] : memref<36x32xf32, #tpu.memory_space<vmem>>, vector<1x32xf32>
    tpu.vector_store %arg15[%c18, %c0_2], %0 {strides = array<i32>} : memref<36x32xf32, #tpu.memory_space<vmem>>, vector<1x32xf32>,
    %c35 = arith.constant 35 : index
    %c0_3 = arith.constant 0 : index
    %4 = vector.load %arg15[%c35, %c0_3] : memref<36x32xf32, #tpu.memory_space<vmem>>, vector<1x32xf32>
    tpu.vector_store %arg15[%c35, %c0_3], %0 {strides = array<i32>} : memref<36x32xf32, #tpu.memory_space<vmem>>, vector<1x32xf32>,
    %c0_4 = arith.constant 0 : index
    %c0_5 = arith.constant 0 : index
    %5 = vector.load %arg16[%c0_4, %c0_5] : memref<20x32xf32, #tpu.memory_space<vmem>>, vector<1x32xf32>
    tpu.vector_store %arg16[%c0_4, %c0_5], %0 {strides = array<i32>} : memref<20x32xf32, #tpu.memory_space<vmem>>, vector<1x32xf32>,
    %c9 = arith.constant 9 : index
    %c0_6 = arith.constant 0 : index
    %6 = vector.load %arg16[%c9, %c0_6] : memref<20x32xf32, #tpu.memory_space<vmem>>, vector<1x32xf32>
    tpu.vector_store %arg16[%c9, %c0_6], %0 {strides = array<i32>} : memref<20x32xf32, #tpu.memory_space<vmem>>, vector<1x32xf32>,
    %c10 = arith.constant 10 : index
    %c0_7 = arith.constant 0 : index
    %7 = vector.load %arg16[%c10, %c0_7] : memref<20x32xf32, #tpu.memory_space<vmem>>, vector<1x32xf32>
    tpu.vector_store %arg16[%c10, %c0_7], %0 {strides = array<i32>} : memref<20x32xf32, #tpu.memory_space<vmem>>, vector<1x32xf32>,
    %c19 = arith.constant 19 : index
    %c0_8 = arith.constant 0 : index
    %8 = vector.load %arg16[%c19, %c0_8] : memref<20x32xf32, #tpu.memory_space<vmem>>, vector<1x32xf32>
    tpu.vector_store %arg16[%c19, %c0_8], %0 {strides = array<i32>} : memref<20x32xf32, #tpu.memory_space<vmem>>, vector<1x32xf32>,
    %c0_9 = arith.constant 0 : index
    %c0_10 = arith.constant 0 : index
    %9 = vector.load %arg17[%c0_9, %c0_10] : memref<12x32xf32, #tpu.memory_space<vmem>>, vector<1x32xf32>
    tpu.vector_store %arg17[%c0_9, %c0_10], %0 {strides = array<i32>} : memref<12x32xf32, #tpu.memory_space<vmem>>, vector<1x32xf32>,
    %c5 = arith.constant 5 : index
    %c0_11 = arith.constant 0 : index
    %10 = vector.load %arg17[%c5, %c0_11] : memref<12x32xf32, #tpu.memory_space<vmem>>, vector<1x32xf32>
    tpu.vector_store %arg17[%c5, %c0_11], %0 {strides = array<i32>} : memref<12x32xf32, #tpu.memory_space<vmem>>, vector<1x32xf32>,
    %c6 = arith.constant 6 : index
    %c0_12 = arith.constant 0 : index
    %11 = vector.load %arg17[%c6, %c0_12] : memref<12x32xf32, #tpu.memory_space<vmem>>, vector<1x32xf32>
    tpu.vector_store %arg17[%c6, %c0_12], %0 {strides = array<i32>} : memref<12x32xf32, #tpu.memory_space<vmem>>, vector<1x32xf32>,
    %c11 = arith.constant 11 : index
    %c0_13 = arith.constant 0 : index
    %12 = vector.load %arg17[%c11, %c0_13] : memref<12x32xf32, #tpu.memory_space<vmem>>, vector<1x32xf32>
    tpu.vector_store %arg17[%c11, %c0_13], %0 {strides = array<i32>} : memref<12x32xf32, #tpu.memory_space<vmem>>, vector<1x32xf32>,
    %c0_14 = arith.constant 0 : index
    %c0_15 = arith.constant 0 : index
    %13 = vector.load %arg1[%c0_14, %c0_15] : memref<36x16xf32, #tpu.memory_space<vmem>>, vector<34x16xf32>
    %c0_16 = arith.constant 0 : index
    %c0_17 = arith.constant 0 : index
    %14 = vector.load %arg2[%c0_16, %c0_17] : memref<48x32xf32, #tpu.memory_space<vmem>>, vector<16x32xf32>
    %cst_18 = arith.constant dense<0.000000e+00> : vector<34x32xf32>
    %15 = tpu.matmul %13, %14, %cst_18 {dimension_numbers = #tpu.dot_dimension_numbers<[1], [0], [0], [1], [0, 0, 1, 1], [], []>} : vector<34x16xf32>, vector<16x32xf32>, vector<34x32xf32> -> vector<34x32xf32>
    %c1 = arith.constant 1 : index
    %c0_19 = arith.constant 0 : index
    %16 = vector.load %arg1[%c1, %c0_19] : memref<36x16xf32, #tpu.memory_space<vmem>>, vector<34x16xf32>
    %c16 = arith.constant 16 : index
    %c0_20 = arith.constant 0 : index
    %17 = vector.load %arg2[%c16, %c0_20] : memref<48x32xf32, #tpu.memory_space<vmem>>, vector<16x32xf32>
    %cst_21 = arith.constant dense<0.000000e+00> : vector<34x32xf32>
    %18 = tpu.matmul %16, %17, %cst_21 {dimension_numbers = #tpu.dot_dimension_numbers<[1], [0], [0], [1], [0, 0, 1, 1], [], []>} : vector<34x16xf32>, vector<16x32xf32>, vector<34x32xf32> -> vector<34x32xf32>
    %19 = arith.addf %15, %18 : vector<34x32xf32>
    %c2 = arith.constant 2 : index
    %c0_22 = arith.constant 0 : index
    %20 = vector.load %arg1[%c2, %c0_22] : memref<36x16xf32, #tpu.memory_space<vmem>>, vector<34x16xf32>
    %c32 = arith.constant 32 : index
    %c0_23 = arith.constant 0 : index
    %21 = vector.load %arg2[%c32, %c0_23] : memref<48x32xf32, #tpu.memory_space<vmem>>, vector<16x32xf32>
    %cst_24 = arith.constant dense<0.000000e+00> : vector<34x32xf32>
    %22 = tpu.matmul %20, %21, %cst_24 {dimension_numbers = #tpu.dot_dimension_numbers<[1], [0], [0], [1], [0, 0, 1, 1], [], []>} : vector<34x16xf32>, vector<16x32xf32>, vector<34x32xf32> -> vector<34x32xf32>
    %23 = arith.addf %19, %22 : vector<34x32xf32>
    %24 = vector.extract_strided_slice %23 {offsets = [0, 0], sizes = [16, 32], strides = [1, 1]} : vector<34x32xf32> to vector<16x32xf32>
    %25 = vector.extract_strided_slice %23 {offsets = [18, 0], sizes = [16, 32], strides = [1, 1]} : vector<34x32xf32> to vector<16x32xf32>
    %c0_25 = arith.constant 0 : index
    %c0_26 = arith.constant 0 : index
    %26 = vector.load %arg3[%c0_25, %c0_26] : memref<1x32xf32, #tpu.memory_space<vmem>>, vector<1x32xf32>
    %c0_27 = arith.constant 0 : index
    %c0_28 = arith.constant 0 : index
    %27 = vector.load %arg4[%c0_27, %c0_28] : memref<1x32xf32, #tpu.memory_space<vmem>>, vector<1x32xf32>
    %cst_29 = arith.constant dense<0.000000e+00> : vector<32xf32>
    %28 = vector.multi_reduction <add>, %24, %cst_29 [0] : vector<16x32xf32> to vector<32xf32>
    %29 = vector.shape_cast %28 : vector<32xf32> to vector<1x32xf32>
    %cst_30 = arith.constant 0.000000e+00 : f32
    %30 = vector.broadcast %cst_30 : f32 to vector<1x32xf32>
    %31 = arith.addf %30, %29 : vector<1x32xf32>
    %cst_31 = arith.constant dense<0.000000e+00> : vector<32xf32>
    %32 = vector.multi_reduction <add>, %25, %cst_31 [0] : vector<16x32xf32> to vector<32xf32>
    %33 = vector.shape_cast %32 : vector<32xf32> to vector<1x32xf32>
    %34 = arith.addf %31, %33 : vector<1x32xf32>
    %cst_32 = arith.constant 3.200000e+01 : f32
    %35 = vector.broadcast %cst_32 : f32 to vector<1x32xf32>
    %36 = arith.divf %34, %35 : vector<1x32xf32>
    %37 = vector.broadcast %36 : vector<1x32xf32> to vector<16x32xf32>
    %38 = arith.subf %24, %37 : vector<16x32xf32>
    %39 = arith.mulf %38, %38 : vector<16x32xf32>
    %cst_33 = arith.constant dense<0.000000e+00> : vector<32xf32>
    %40 = vector.multi_reduction <add>, %39, %cst_33 [0] : vector<16x32xf32> to vector<32xf32>
    %41 = vector.shape_cast %40 : vector<32xf32> to vector<1x32xf32>
    %cst_34 = arith.constant 0.000000e+00 : f32
    %42 = vector.broadcast %cst_34 : f32 to vector<1x32xf32>
    %43 = arith.addf %42, %41 : vector<1x32xf32>
    %44 = vector.broadcast %36 : vector<1x32xf32> to vector<16x32xf32>
    %45 = arith.subf %25, %44 : vector<16x32xf32>
    %46 = arith.mulf %45, %45 : vector<16x32xf32>
    %cst_35 = arith.constant dense<0.000000e+00> : vector<32xf32>
    %47 = vector.multi_reduction <add>, %46, %cst_35 [0] : vector<16x32xf32> to vector<32xf32>
    %48 = vector.shape_cast %47 : vector<32xf32> to vector<1x32xf32>
    %49 = arith.addf %43, %48 : vector<1x32xf32>
    %cst_36 = arith.constant 3.200000e+01 : f32
    %50 = vector.broadcast %cst_36 : f32 to vector<1x32xf32>
    %51 = arith.divf %49, %50 : vector<1x32xf32>
    %cst_37 = arith.constant 9.99999974E-6 : f32
    %52 = vector.broadcast %cst_37 : f32 to vector<1x32xf32>
    %53 = arith.addf %51, %52 : vector<1x32xf32>
    %54 = math.rsqrt %53 : vector<1x32xf32>
    %55 = arith.mulf %26, %54 : vector<1x32xf32>
    %56 = arith.mulf %36, %55 : vector<1x32xf32>
    %57 = arith.subf %27, %56 : vector<1x32xf32>
    %58 = vector.broadcast %55 : vector<1x32xf32> to vector<16x32xf32>
    %59 = arith.mulf %24, %58 : vector<16x32xf32>
    %60 = vector.broadcast %57 : vector<1x32xf32> to vector<16x32xf32>
    %61 = arith.addf %59, %60 : vector<16x32xf32>
    %cst_38 = arith.constant 0.000000e+00 : f32
    %62 = vector.broadcast %cst_38 : f32 to vector<16x32xf32>
    %63 = arith.cmpf oge, %61, %62 : vector<16x32xf32>
    %cst_39 = arith.constant 2.000000e-01 : f32
    %64 = vector.broadcast %cst_39 : f32 to vector<16x32xf32>
    %65 = arith.mulf %64, %61 : vector<16x32xf32>
    %66 = arith.select %63, %61, %65 : vector<16x32xi1>, vector<16x32xf32>
    %67 = vector.broadcast %55 : vector<1x32xf32> to vector<16x32xf32>
    %68 = arith.mulf %25, %67 : vector<16x32xf32>
    %69 = vector.broadcast %57 : vector<1x32xf32> to vector<16x32xf32>
    %70 = arith.addf %68, %69 : vector<16x32xf32>
    %cst_40 = arith.constant 0.000000e+00 : f32
    %71 = vector.broadcast %cst_40 : f32 to vector<16x32xf32>
    %72 = arith.cmpf oge, %70, %71 : vector<16x32xf32>
    %cst_41 = arith.constant 2.000000e-01 : f32
    %73 = vector.broadcast %cst_41 : f32 to vector<16x32xf32>
    %74 = arith.mulf %73, %70 : vector<16x32xf32>
    %75 = arith.select %72, %70, %74 : vector<16x32xi1>, vector<16x32xf32>
    %c1_42 = arith.constant 1 : index
    %c0_43 = arith.constant 0 : index
    %76 = vector.load %arg15[%c1_42, %c0_43] : memref<36x32xf32, #tpu.memory_space<vmem>>, vector<16x32xf32>
    tpu.vector_store %arg15[%c1_42, %c0_43], %66 {strides = array<i32>} : memref<36x32xf32, #tpu.memory_space<vmem>>, vector<16x32xf32>,
    %c19_44 = arith.constant 19 : index
    %c0_45 = arith.constant 0 : index
    %77 = vector.load %arg15[%c19_44, %c0_45] : memref<36x32xf32, #tpu.memory_space<vmem>>, vector<16x32xf32>
    tpu.vector_store %arg15[%c19_44, %c0_45], %75 {strides = array<i32>} : memref<36x32xf32, #tpu.memory_space<vmem>>, vector<16x32xf32>,
    %c0_46 = arith.constant 0 : index
    %c0_47 = arith.constant 0 : index
    %78 = tpu.strided_load %arg15[%c0_46, %c0_47] {strides = array<i32: 2, 1>} : memref<36x32xf32, #tpu.memory_space<vmem>>, vector<17x32xf32>
    %c0_48 = arith.constant 0 : index
    %c0_49 = arith.constant 0 : index
    %79 = vector.load %arg5[%c0_48, %c0_49] : memref<128x64xf32, #tpu.memory_space<vmem>>, vector<32x64xf32>
    %cst_50 = arith.constant dense<0.000000e+00> : vector<17x64xf32>
    %80 = tpu.matmul %78, %79, %cst_50 {dimension_numbers = #tpu.dot_dimension_numbers<[1], [0], [0], [1], [0, 0, 1, 1], [], []>} : vector<17x32xf32>, vector<32x64xf32>, vector<17x64xf32> -> vector<17x64xf32>
    %c1_51 = arith.constant 1 : index
    %c0_52 = arith.constant 0 : index
    %81 = tpu.strided_load %arg15[%c1_51, %c0_52] {strides = array<i32: 2, 1>} : memref<36x32xf32, #tpu.memory_space<vmem>>, vector<17x32xf32>
    %c32_53 = arith.constant 32 : index
    %c0_54 = arith.constant 0 : index
    %82 = vector.load %arg5[%c32_53, %c0_54] : memref<128x64xf32, #tpu.memory_space<vmem>>, vector<32x64xf32>
    %cst_55 = arith.constant dense<0.000000e+00> : vector<17x64xf32>
    %83 = tpu.matmul %81, %82, %cst_55 {dimension_numbers = #tpu.dot_dimension_numbers<[1], [0], [0], [1], [0, 0, 1, 1], [], []>} : vector<17x32xf32>, vector<32x64xf32>, vector<17x64xf32> -> vector<17x64xf32>
    %84 = arith.addf %80, %83 : vector<17x64xf32>
    %c2_56 = arith.constant 2 : index
    %c0_57 = arith.constant 0 : index
    %85 = tpu.strided_load %arg15[%c2_56, %c0_57] {strides = array<i32: 2, 1>} : memref<36x32xf32, #tpu.memory_space<vmem>>, vector<17x32xf32>
    %c64 = arith.constant 64 : index
    %c0_58 = arith.constant 0 : index
    %86 = vector.load %arg5[%c64, %c0_58] : memref<128x64xf32, #tpu.memory_space<vmem>>, vector<32x64xf32>
    %cst_59 = arith.constant dense<0.000000e+00> : vector<17x64xf32>
    %87 = tpu.matmul %85, %86, %cst_59 {dimension_numbers = #tpu.dot_dimension_numbers<[1], [0], [0], [1], [0, 0, 1, 1], [], []>} : vector<17x32xf32>, vector<32x64xf32>, vector<17x64xf32> -> vector<17x64xf32>
    %88 = arith.addf %84, %87 : vector<17x64xf32>
    %c3 = arith.constant 3 : index
    %c0_60 = arith.constant 0 : index
    %89 = tpu.strided_load %arg15[%c3, %c0_60] {strides = array<i32: 2, 1>} : memref<36x32xf32, #tpu.memory_space<vmem>>, vector<17x32xf32>
    %c96 = arith.constant 96 : index
    %c0_61 = arith.constant 0 : index
    %90 = vector.load %arg5[%c96, %c0_61] : memref<128x64xf32, #tpu.memory_space<vmem>>, vector<32x64xf32>
    %cst_62 = arith.constant dense<0.000000e+00> : vector<17x64xf32>
    %91 = tpu.matmul %89, %90, %cst_62 {dimension_numbers = #tpu.dot_dimension_numbers<[1], [0], [0], [1], [0, 0, 1, 1], [], []>} : vector<17x32xf32>, vector<32x64xf32>, vector<17x64xf32> -> vector<17x64xf32>
    %92 = arith.addf %88, %91 : vector<17x64xf32>
    %93 = vector.extract_strided_slice %92 {offsets = [0, 0], sizes = [8, 32], strides = [1, 1]} : vector<17x64xf32> to vector<8x32xf32>
    %94 = vector.extract_strided_slice %92 {offsets = [9, 0], sizes = [8, 32], strides = [1, 1]} : vector<17x64xf32> to vector<8x32xf32>
    %95 = vector.extract_strided_slice %92 {offsets = [0, 32], sizes = [8, 32], strides = [1, 1]} : vector<17x64xf32> to vector<8x32xf32>
    %96 = vector.extract_strided_slice %92 {offsets = [9, 32], sizes = [8, 32], strides = [1, 1]} : vector<17x64xf32> to vector<8x32xf32>
    %c0_63 = arith.constant 0 : index
    %c0_64 = arith.constant 0 : index
    %97 = vector.load %arg6[%c0_63, %c0_64] : memref<1x32xf32, #tpu.memory_space<vmem>>, vector<1x32xf32>
    %c0_65 = arith.constant 0 : index
    %c0_66 = arith.constant 0 : index
    %98 = vector.load %arg7[%c0_65, %c0_66] : memref<1x32xf32, #tpu.memory_space<vmem>>, vector<1x32xf32>
    %cst_67 = arith.constant dense<0.000000e+00> : vector<32xf32>
    %99 = vector.multi_reduction <add>, %93, %cst_67 [0] : vector<8x32xf32> to vector<32xf32>
    %100 = vector.shape_cast %99 : vector<32xf32> to vector<1x32xf32>
    %cst_68 = arith.constant 0.000000e+00 : f32
    %101 = vector.broadcast %cst_68 : f32 to vector<1x32xf32>
    %102 = arith.addf %101, %100 : vector<1x32xf32>
    %cst_69 = arith.constant dense<0.000000e+00> : vector<32xf32>
    %103 = vector.multi_reduction <add>, %94, %cst_69 [0] : vector<8x32xf32> to vector<32xf32>
    %104 = vector.shape_cast %103 : vector<32xf32> to vector<1x32xf32>
    %105 = arith.addf %102, %104 : vector<1x32xf32>
    %cst_70 = arith.constant 1.600000e+01 : f32
    %106 = vector.broadcast %cst_70 : f32 to vector<1x32xf32>
    %107 = arith.divf %105, %106 : vector<1x32xf32>
    %108 = vector.broadcast %107 : vector<1x32xf32> to vector<8x32xf32>
    %109 = arith.subf %93, %108 : vector<8x32xf32>
    %110 = arith.mulf %109, %109 : vector<8x32xf32>
    %cst_71 = arith.constant dense<0.000000e+00> : vector<32xf32>
    %111 = vector.multi_reduction <add>, %110, %cst_71 [0] : vector<8x32xf32> to vector<32xf32>
    %112 = vector.shape_cast %111 : vector<32xf32> to vector<1x32xf32>
    %cst_72 = arith.constant 0.000000e+00 : f32
    %113 = vector.broadcast %cst_72 : f32 to vector<1x32xf32>
    %114 = arith.addf %113, %112 : vector<1x32xf32>
    %115 = vector.broadcast %107 : vector<1x32xf32> to vector<8x32xf32>
    %116 = arith.subf %94, %115 : vector<8x32xf32>
    %117 = arith.mulf %116, %116 : vector<8x32xf32>
    %cst_73 = arith.constant dense<0.000000e+00> : vector<32xf32>
    %118 = vector.multi_reduction <add>, %117, %cst_73 [0] : vector<8x32xf32> to vector<32xf32>
    %119 = vector.shape_cast %118 : vector<32xf32> to vector<1x32xf32>
    %120 = arith.addf %114, %119 : vector<1x32xf32>
    %cst_74 = arith.constant 1.600000e+01 : f32
    %121 = vector.broadcast %cst_74 : f32 to vector<1x32xf32>
    %122 = arith.divf %120, %121 : vector<1x32xf32>
    %cst_75 = arith.constant 9.99999974E-6 : f32
    %123 = vector.broadcast %cst_75 : f32 to vector<1x32xf32>
    %124 = arith.addf %122, %123 : vector<1x32xf32>
    %125 = math.rsqrt %124 : vector<1x32xf32>
    %126 = arith.mulf %97, %125 : vector<1x32xf32>
    %127 = arith.mulf %107, %126 : vector<1x32xf32>
    %128 = arith.subf %98, %127 : vector<1x32xf32>
    %129 = vector.broadcast %126 : vector<1x32xf32> to vector<8x32xf32>
    %130 = arith.mulf %93, %129 : vector<8x32xf32>
    %131 = vector.broadcast %128 : vector<1x32xf32> to vector<8x32xf32>
    %132 = arith.addf %130, %131 : vector<8x32xf32>
    %133 = arith.addf %132, %95 : vector<8x32xf32>
    %cst_76 = arith.constant 0.000000e+00 : f32
    %134 = vector.broadcast %cst_76 : f32 to vector<8x32xf32>
    %135 = arith.cmpf oge, %133, %134 : vector<8x32xf32>
    %cst_77 = arith.constant 2.000000e-01 : f32
    %136 = vector.broadcast %cst_77 : f32 to vector<8x32xf32>
    %137 = arith.mulf %136, %133 : vector<8x32xf32>
    %138 = arith.select %135, %133, %137 : vector<8x32xi1>, vector<8x32xf32>
    %139 = vector.broadcast %126 : vector<1x32xf32> to vector<8x32xf32>
    %140 = arith.mulf %94, %139 : vector<8x32xf32>
    %141 = vector.broadcast %128 : vector<1x32xf32> to vector<8x32xf32>
    %142 = arith.addf %140, %141 : vector<8x32xf32>
    %143 = arith.addf %142, %96 : vector<8x32xf32>
    %cst_78 = arith.constant 0.000000e+00 : f32
    %144 = vector.broadcast %cst_78 : f32 to vector<8x32xf32>
    %145 = arith.cmpf oge, %143, %144 : vector<8x32xf32>
    %cst_79 = arith.constant 2.000000e-01 : f32
    %146 = vector.broadcast %cst_79 : f32 to vector<8x32xf32>
    %147 = arith.mulf %146, %143 : vector<8x32xf32>
    %148 = arith.select %145, %143, %147 : vector<8x32xi1>, vector<8x32xf32>
    %c1_80 = arith.constant 1 : index
    %c0_81 = arith.constant 0 : index
    %149 = vector.load %arg16[%c1_80, %c0_81] : memref<20x32xf32, #tpu.memory_space<vmem>>, vector<8x32xf32>
    tpu.vector_store %arg16[%c1_80, %c0_81], %138 {strides = array<i32>} : memref<20x32xf32, #tpu.memory_space<vmem>>, vector<8x32xf32>,
    %c11_82 = arith.constant 11 : index
    %c0_83 = arith.constant 0 : index
    %150 = vector.load %arg16[%c11_82, %c0_83] : memref<20x32xf32, #tpu.memory_space<vmem>>, vector<8x32xf32>
    tpu.vector_store %arg16[%c11_82, %c0_83], %148 {strides = array<i32>} : memref<20x32xf32, #tpu.memory_space<vmem>>, vector<8x32xf32>,
    %c0_84 = arith.constant 0 : index
    %c0_85 = arith.constant 0 : index
    %151 = tpu.strided_load %arg16[%c0_84, %c0_85] {strides = array<i32: 2, 1>} : memref<20x32xf32, #tpu.memory_space<vmem>>, vector<9x32xf32>
    %c0_86 = arith.constant 0 : index
    %c0_87 = arith.constant 0 : index
    %152 = vector.load %arg8[%c0_86, %c0_87] : memref<128x64xf32, #tpu.memory_space<vmem>>, vector<32x64xf32>
    %cst_88 = arith.constant dense<0.000000e+00> : vector<9x64xf32>
    %153 = tpu.matmul %151, %152, %cst_88 {dimension_numbers = #tpu.dot_dimension_numbers<[1], [0], [0], [1], [0, 0, 1, 1], [], []>} : vector<9x32xf32>, vector<32x64xf32>, vector<9x64xf32> -> vector<9x64xf32>
    %c1_89 = arith.constant 1 : index
    %c0_90 = arith.constant 0 : index
    %154 = tpu.strided_load %arg16[%c1_89, %c0_90] {strides = array<i32: 2, 1>} : memref<20x32xf32, #tpu.memory_space<vmem>>, vector<9x32xf32>
    %c32_91 = arith.constant 32 : index
    %c0_92 = arith.constant 0 : index
    %155 = vector.load %arg8[%c32_91, %c0_92] : memref<128x64xf32, #tpu.memory_space<vmem>>, vector<32x64xf32>
    %cst_93 = arith.constant dense<0.000000e+00> : vector<9x64xf32>
    %156 = tpu.matmul %154, %155, %cst_93 {dimension_numbers = #tpu.dot_dimension_numbers<[1], [0], [0], [1], [0, 0, 1, 1], [], []>} : vector<9x32xf32>, vector<32x64xf32>, vector<9x64xf32> -> vector<9x64xf32>
    %157 = arith.addf %153, %156 : vector<9x64xf32>
    %c2_94 = arith.constant 2 : index
    %c0_95 = arith.constant 0 : index
    %158 = tpu.strided_load %arg16[%c2_94, %c0_95] {strides = array<i32: 2, 1>} : memref<20x32xf32, #tpu.memory_space<vmem>>, vector<9x32xf32>
    %c64_96 = arith.constant 64 : index
    %c0_97 = arith.constant 0 : index
    %159 = vector.load %arg8[%c64_96, %c0_97] : memref<128x64xf32, #tpu.memory_space<vmem>>, vector<32x64xf32>
    %cst_98 = arith.constant dense<0.000000e+00> : vector<9x64xf32>
    %160 = tpu.matmul %158, %159, %cst_98 {dimension_numbers = #tpu.dot_dimension_numbers<[1], [0], [0], [1], [0, 0, 1, 1], [], []>} : vector<9x32xf32>, vector<32x64xf32>, vector<9x64xf32> -> vector<9x64xf32>
    %161 = arith.addf %157, %160 : vector<9x64xf32>
    %c3_99 = arith.constant 3 : index
    %c0_100 = arith.constant 0 : index
    %162 = tpu.strided_load %arg16[%c3_99, %c0_100] {strides = array<i32: 2, 1>} : memref<20x32xf32, #tpu.memory_space<vmem>>, vector<9x32xf32>
    %c96_101 = arith.constant 96 : index
    %c0_102 = arith.constant 0 : index
    %163 = vector.load %arg8[%c96_101, %c0_102] : memref<128x64xf32, #tpu.memory_space<vmem>>, vector<32x64xf32>
    %cst_103 = arith.constant dense<0.000000e+00> : vector<9x64xf32>
    %164 = tpu.matmul %162, %163, %cst_103 {dimension_numbers = #tpu.dot_dimension_numbers<[1], [0], [0], [1], [0, 0, 1, 1], [], []>} : vector<9x32xf32>, vector<32x64xf32>, vector<9x64xf32> -> vector<9x64xf32>
    %165 = arith.addf %161, %164 : vector<9x64xf32>
    %166 = vector.extract_strided_slice %165 {offsets = [0, 0], sizes = [4, 32], strides = [1, 1]} : vector<9x64xf32> to vector<4x32xf32>
    %167 = vector.extract_strided_slice %165 {offsets = [5, 0], sizes = [4, 32], strides = [1, 1]} : vector<9x64xf32> to vector<4x32xf32>
    %168 = vector.extract_strided_slice %165 {offsets = [0, 32], sizes = [4, 32], strides = [1, 1]} : vector<9x64xf32> to vector<4x32xf32>
    %169 = vector.extract_strided_slice %165 {offsets = [5, 32], sizes = [4, 32], strides = [1, 1]} : vector<9x64xf32> to vector<4x32xf32>
    %c0_104 = arith.constant 0 : index
    %c0_105 = arith.constant 0 : index
    %170 = vector.load %arg9[%c0_104, %c0_105] : memref<1x32xf32, #tpu.memory_space<vmem>>, vector<1x32xf32>
    %c0_106 = arith.constant 0 : index
    %c0_107 = arith.constant 0 : index
    %171 = vector.load %arg10[%c0_106, %c0_107] : memref<1x32xf32, #tpu.memory_space<vmem>>, vector<1x32xf32>
    %cst_108 = arith.constant dense<0.000000e+00> : vector<32xf32>
    %172 = vector.multi_reduction <add>, %166, %cst_108 [0] : vector<4x32xf32> to vector<32xf32>
    %173 = vector.shape_cast %172 : vector<32xf32> to vector<1x32xf32>
    %cst_109 = arith.constant 0.000000e+00 : f32
    %174 = vector.broadcast %cst_109 : f32 to vector<1x32xf32>
    %175 = arith.addf %174, %173 : vector<1x32xf32>
    %cst_110 = arith.constant dense<0.000000e+00> : vector<32xf32>
    %176 = vector.multi_reduction <add>, %167, %cst_110 [0] : vector<4x32xf32> to vector<32xf32>
    %177 = vector.shape_cast %176 : vector<32xf32> to vector<1x32xf32>
    %178 = arith.addf %175, %177 : vector<1x32xf32>
    %cst_111 = arith.constant 8.000000e+00 : f32
    %179 = vector.broadcast %cst_111 : f32 to vector<1x32xf32>
    %180 = arith.divf %178, %179 : vector<1x32xf32>
    %181 = vector.broadcast %180 : vector<1x32xf32> to vector<4x32xf32>
    %182 = arith.subf %166, %181 : vector<4x32xf32>
    %183 = arith.mulf %182, %182 : vector<4x32xf32>
    %cst_112 = arith.constant dense<0.000000e+00> : vector<32xf32>
    %184 = vector.multi_reduction <add>, %183, %cst_112 [0] : vector<4x32xf32> to vector<32xf32>
    %185 = vector.shape_cast %184 : vector<32xf32> to vector<1x32xf32>
    %cst_113 = arith.constant 0.000000e+00 : f32
    %186 = vector.broadcast %cst_113 : f32 to vector<1x32xf32>
    %187 = arith.addf %186, %185 : vector<1x32xf32>
    %188 = vector.broadcast %180 : vector<1x32xf32> to vector<4x32xf32>
    %189 = arith.subf %167, %188 : vector<4x32xf32>
    %190 = arith.mulf %189, %189 : vector<4x32xf32>
    %cst_114 = arith.constant dense<0.000000e+00> : vector<32xf32>
    %191 = vector.multi_reduction <add>, %190, %cst_114 [0] : vector<4x32xf32> to vector<32xf32>
    %192 = vector.shape_cast %191 : vector<32xf32> to vector<1x32xf32>
    %193 = arith.addf %187, %192 : vector<1x32xf32>
    %cst_115 = arith.constant 8.000000e+00 : f32
    %194 = vector.broadcast %cst_115 : f32 to vector<1x32xf32>
    %195 = arith.divf %193, %194 : vector<1x32xf32>
    %cst_116 = arith.constant 9.99999974E-6 : f32
    %196 = vector.broadcast %cst_116 : f32 to vector<1x32xf32>
    %197 = arith.addf %195, %196 : vector<1x32xf32>
    %198 = math.rsqrt %197 : vector<1x32xf32>
    %199 = arith.mulf %170, %198 : vector<1x32xf32>
    %200 = arith.mulf %180, %199 : vector<1x32xf32>
    %201 = arith.subf %171, %200 : vector<1x32xf32>
    %202 = vector.broadcast %199 : vector<1x32xf32> to vector<4x32xf32>
    %203 = arith.mulf %166, %202 : vector<4x32xf32>
    %204 = vector.broadcast %201 : vector<1x32xf32> to vector<4x32xf32>
    %205 = arith.addf %203, %204 : vector<4x32xf32>
    %206 = arith.addf %205, %168 : vector<4x32xf32>
    %cst_117 = arith.constant 0.000000e+00 : f32
    %207 = vector.broadcast %cst_117 : f32 to vector<4x32xf32>
    %208 = arith.cmpf oge, %206, %207 : vector<4x32xf32>
    %cst_118 = arith.constant 2.000000e-01 : f32
    %209 = vector.broadcast %cst_118 : f32 to vector<4x32xf32>
    %210 = arith.mulf %209, %206 : vector<4x32xf32>
    %211 = arith.select %208, %206, %210 : vector<4x32xi1>, vector<4x32xf32>
    %212 = vector.broadcast %199 : vector<1x32xf32> to vector<4x32xf32>
    %213 = arith.mulf %167, %212 : vector<4x32xf32>
    %214 = vector.broadcast %201 : vector<1x32xf32> to vector<4x32xf32>
    %215 = arith.addf %213, %214 : vector<4x32xf32>
    %216 = arith.addf %215, %169 : vector<4x32xf32>
    %cst_119 = arith.constant 0.000000e+00 : f32
    %217 = vector.broadcast %cst_119 : f32 to vector<4x32xf32>
    %218 = arith.cmpf oge, %216, %217 : vector<4x32xf32>
    %cst_120 = arith.constant 2.000000e-01 : f32
    %219 = vector.broadcast %cst_120 : f32 to vector<4x32xf32>
    %220 = arith.mulf %219, %216 : vector<4x32xf32>
    %221 = arith.select %218, %216, %220 : vector<4x32xi1>, vector<4x32xf32>
    %c1_121 = arith.constant 1 : index
    %c0_122 = arith.constant 0 : index
    %222 = vector.load %arg17[%c1_121, %c0_122] : memref<12x32xf32, #tpu.memory_space<vmem>>, vector<4x32xf32>
    tpu.vector_store %arg17[%c1_121, %c0_122], %211 {strides = array<i32>} : memref<12x32xf32, #tpu.memory_space<vmem>>, vector<4x32xf32>,
    %c7 = arith.constant 7 : index
    %c0_123 = arith.constant 0 : index
    %223 = vector.load %arg17[%c7, %c0_123] : memref<12x32xf32, #tpu.memory_space<vmem>>, vector<4x32xf32>
    tpu.vector_store %arg17[%c7, %c0_123], %221 {strides = array<i32>} : memref<12x32xf32, #tpu.memory_space<vmem>>, vector<4x32xf32>,
    %c0_124 = arith.constant 0 : index
    %c0_125 = arith.constant 0 : index
    %224 = tpu.strided_load %arg17[%c0_124, %c0_125] {strides = array<i32: 2, 1>} : memref<12x32xf32, #tpu.memory_space<vmem>>, vector<5x32xf32>
    %c0_126 = arith.constant 0 : index
    %c0_127 = arith.constant 0 : index
    %225 = vector.load %arg11[%c0_126, %c0_127] : memref<128x64xf32, #tpu.memory_space<vmem>>, vector<32x64xf32>
    %cst_128 = arith.constant dense<0.000000e+00> : vector<5x64xf32>
    %226 = tpu.matmul %224, %225, %cst_128 {dimension_numbers = #tpu.dot_dimension_numbers<[1], [0], [0], [1], [0, 0, 1, 1], [], []>} : vector<5x32xf32>, vector<32x64xf32>, vector<5x64xf32> -> vector<5x64xf32>
    %c1_129 = arith.constant 1 : index
    %c0_130 = arith.constant 0 : index
    %227 = tpu.strided_load %arg17[%c1_129, %c0_130] {strides = array<i32: 2, 1>} : memref<12x32xf32, #tpu.memory_space<vmem>>, vector<5x32xf32>
    %c32_131 = arith.constant 32 : index
    %c0_132 = arith.constant 0 : index
    %228 = vector.load %arg11[%c32_131, %c0_132] : memref<128x64xf32, #tpu.memory_space<vmem>>, vector<32x64xf32>
    %cst_133 = arith.constant dense<0.000000e+00> : vector<5x64xf32>
    %229 = tpu.matmul %227, %228, %cst_133 {dimension_numbers = #tpu.dot_dimension_numbers<[1], [0], [0], [1], [0, 0, 1, 1], [], []>} : vector<5x32xf32>, vector<32x64xf32>, vector<5x64xf32> -> vector<5x64xf32>
    %230 = arith.addf %226, %229 : vector<5x64xf32>
    %c2_134 = arith.constant 2 : index
    %c0_135 = arith.constant 0 : index
    %231 = tpu.strided_load %arg17[%c2_134, %c0_135] {strides = array<i32: 2, 1>} : memref<12x32xf32, #tpu.memory_space<vmem>>, vector<5x32xf32>
    %c64_136 = arith.constant 64 : index
    %c0_137 = arith.constant 0 : index
    %232 = vector.load %arg11[%c64_136, %c0_137] : memref<128x64xf32, #tpu.memory_space<vmem>>, vector<32x64xf32>
    %cst_138 = arith.constant dense<0.000000e+00> : vector<5x64xf32>
    %233 = tpu.matmul %231, %232, %cst_138 {dimension_numbers = #tpu.dot_dimension_numbers<[1], [0], [0], [1], [0, 0, 1, 1], [], []>} : vector<5x32xf32>, vector<32x64xf32>, vector<5x64xf32> -> vector<5x64xf32>
    %234 = arith.addf %230, %233 : vector<5x64xf32>
    %c3_139 = arith.constant 3 : index
    %c0_140 = arith.constant 0 : index
    %235 = tpu.strided_load %arg17[%c3_139, %c0_140] {strides = array<i32: 2, 1>} : memref<12x32xf32, #tpu.memory_space<vmem>>, vector<5x32xf32>
    %c96_141 = arith.constant 96 : index
    %c0_142 = arith.constant 0 : index
    %236 = vector.load %arg11[%c96_141, %c0_142] : memref<128x64xf32, #tpu.memory_space<vmem>>, vector<32x64xf32>
    %cst_143 = arith.constant dense<0.000000e+00> : vector<5x64xf32>
    %237 = tpu.matmul %235, %236, %cst_143 {dimension_numbers = #tpu.dot_dimension_numbers<[1], [0], [0], [1], [0, 0, 1, 1], [], []>} : vector<5x32xf32>, vector<32x64xf32>, vector<5x64xf32> -> vector<5x64xf32>
    %238 = arith.addf %234, %237 : vector<5x64xf32>
    %239 = vector.extract_strided_slice %238 {offsets = [0, 0], sizes = [2, 32], strides = [1, 1]} : vector<5x64xf32> to vector<2x32xf32>
    %240 = vector.extract_strided_slice %238 {offsets = [3, 0], sizes = [2, 32], strides = [1, 1]} : vector<5x64xf32> to vector<2x32xf32>
    %241 = vector.extract_strided_slice %238 {offsets = [0, 32], sizes = [2, 32], strides = [1, 1]} : vector<5x64xf32> to vector<2x32xf32>
    %242 = vector.extract_strided_slice %238 {offsets = [3, 32], sizes = [2, 32], strides = [1, 1]} : vector<5x64xf32> to vector<2x32xf32>
    %c0_144 = arith.constant 0 : index
    %c0_145 = arith.constant 0 : index
    %243 = vector.load %arg12[%c0_144, %c0_145] : memref<1x32xf32, #tpu.memory_space<vmem>>, vector<1x32xf32>
    %c0_146 = arith.constant 0 : index
    %c0_147 = arith.constant 0 : index
    %244 = vector.load %arg13[%c0_146, %c0_147] : memref<1x32xf32, #tpu.memory_space<vmem>>, vector<1x32xf32>
    %cst_148 = arith.constant dense<0.000000e+00> : vector<32xf32>
    %245 = vector.multi_reduction <add>, %239, %cst_148 [0] : vector<2x32xf32> to vector<32xf32>
    %246 = vector.shape_cast %245 : vector<32xf32> to vector<1x32xf32>
    %cst_149 = arith.constant 0.000000e+00 : f32
    %247 = vector.broadcast %cst_149 : f32 to vector<1x32xf32>
    %248 = arith.addf %247, %246 : vector<1x32xf32>
    %cst_150 = arith.constant dense<0.000000e+00> : vector<32xf32>
    %249 = vector.multi_reduction <add>, %240, %cst_150 [0] : vector<2x32xf32> to vector<32xf32>
    %250 = vector.shape_cast %249 : vector<32xf32> to vector<1x32xf32>
    %251 = arith.addf %248, %250 : vector<1x32xf32>
    %cst_151 = arith.constant 4.000000e+00 : f32
    %252 = vector.broadcast %cst_151 : f32 to vector<1x32xf32>
    %253 = arith.divf %251, %252 : vector<1x32xf32>
    %254 = vector.broadcast %253 : vector<1x32xf32> to vector<2x32xf32>
    %255 = arith.subf %239, %254 : vector<2x32xf32>
    %256 = arith.mulf %255, %255 : vector<2x32xf32>
    %cst_152 = arith.constant dense<0.000000e+00> : vector<32xf32>
    %257 = vector.multi_reduction <add>, %256, %cst_152 [0] : vector<2x32xf32> to vector<32xf32>
    %258 = vector.shape_cast %257 : vector<32xf32> to vector<1x32xf32>
    %cst_153 = arith.constant 0.000000e+00 : f32
    %259 = vector.broadcast %cst_153 : f32 to vector<1x32xf32>
    %260 = arith.addf %259, %258 : vector<1x32xf32>
    %261 = vector.broadcast %253 : vector<1x32xf32> to vector<2x32xf32>
    %262 = arith.subf %240, %261 : vector<2x32xf32>
    %263 = arith.mulf %262, %262 : vector<2x32xf32>
    %cst_154 = arith.constant dense<0.000000e+00> : vector<32xf32>
    %264 = vector.multi_reduction <add>, %263, %cst_154 [0] : vector<2x32xf32> to vector<32xf32>
    %265 = vector.shape_cast %264 : vector<32xf32> to vector<1x32xf32>
    %266 = arith.addf %260, %265 : vector<1x32xf32>
    %cst_155 = arith.constant 4.000000e+00 : f32
    %267 = vector.broadcast %cst_155 : f32 to vector<1x32xf32>
    %268 = arith.divf %266, %267 : vector<1x32xf32>
    %cst_156 = arith.constant 9.99999974E-6 : f32
    %269 = vector.broadcast %cst_156 : f32 to vector<1x32xf32>
    %270 = arith.addf %268, %269 : vector<1x32xf32>
    %271 = math.rsqrt %270 : vector<1x32xf32>
    %272 = arith.mulf %243, %271 : vector<1x32xf32>
    %273 = arith.mulf %253, %272 : vector<1x32xf32>
    %274 = arith.subf %244, %273 : vector<1x32xf32>
    %275 = vector.broadcast %272 : vector<1x32xf32> to vector<2x32xf32>
    %276 = arith.mulf %239, %275 : vector<2x32xf32>
    %277 = vector.broadcast %274 : vector<1x32xf32> to vector<2x32xf32>
    %278 = arith.addf %276, %277 : vector<2x32xf32>
    %279 = arith.addf %278, %241 : vector<2x32xf32>
    %cst_157 = arith.constant 0.000000e+00 : f32
    %280 = vector.broadcast %cst_157 : f32 to vector<2x32xf32>
    %281 = arith.cmpf oge, %279, %280 : vector<2x32xf32>
    %cst_158 = arith.constant 2.000000e-01 : f32
    %282 = vector.broadcast %cst_158 : f32 to vector<2x32xf32>
    %283 = arith.mulf %282, %279 : vector<2x32xf32>
    %284 = arith.select %281, %279, %283 : vector<2x32xi1>, vector<2x32xf32>
    %285 = vector.broadcast %272 : vector<1x32xf32> to vector<2x32xf32>
    %286 = arith.mulf %240, %285 : vector<2x32xf32>
    %287 = vector.broadcast %274 : vector<1x32xf32> to vector<2x32xf32>
    %288 = arith.addf %286, %287 : vector<2x32xf32>
    %289 = arith.addf %288, %242 : vector<2x32xf32>
    %cst_159 = arith.constant 0.000000e+00 : f32
    %290 = vector.broadcast %cst_159 : f32 to vector<2x32xf32>
    %291 = arith.cmpf oge, %289, %290 : vector<2x32xf32>
    %cst_160 = arith.constant 2.000000e-01 : f32
    %292 = vector.broadcast %cst_160 : f32 to vector<2x32xf32>
    %293 = arith.mulf %292, %289 : vector<2x32xf32>
    %294 = arith.select %291, %289, %293 : vector<2x32xi1>, vector<2x32xf32>
    %c0_161 = arith.constant 0 : index
    %c0_162 = arith.constant 0 : index
    %295 = vector.load %arg14[%c0_161, %c0_162] : memref<4x32xf32, #tpu.memory_space<vmem>>, vector<2x32xf32>
    tpu.vector_store %arg14[%c0_161, %c0_162], %284 {strides = array<i32>} : memref<4x32xf32, #tpu.memory_space<vmem>>, vector<2x32xf32>,
    %c2_163 = arith.constant 2 : index
    %c0_164 = arith.constant 0 : index
    %296 = vector.load %arg14[%c2_163, %c0_164] : memref<4x32xf32, #tpu.memory_space<vmem>>, vector<2x32xf32>
    tpu.vector_store %arg14[%c2_163, %c0_164], %294 {strides = array<i32>} : memref<4x32xf32, #tpu.memory_space<vmem>>, vector<2x32xf32>,
    return
  }
  func.func @transform_0(%arg0: i32) -> (i32, i32) {
    %c0_i32 = arith.constant 0 : i32
    %c0_i32_0 = arith.constant 0 : i32
    %c0_i32_1 = arith.constant 0 : i32
    return %c0_i32, %c0_i32_0 : i32, i32
  }
  func.func @transform_1(%arg0: i32) -> (i32, i32) {
    %c0_i32 = arith.constant 0 : i32
    %c0_i32_0 = arith.constant 0 : i32
    %c0_i32_1 = arith.constant 0 : i32
    return %c0_i32, %c0_i32_0 : i32, i32
  }
  func.func @transform_2(%arg0: i32) -> (i32, i32) {
    %c0_i32 = arith.constant 0 : i32
    %c0_i32_0 = arith.constant 0 : i32
    %c0_i32_1 = arith.constant 0 : i32
    return %c0_i32, %c0_i32_0 : i32, i32
  }
  func.func @transform_3(%arg0: i32) -> (i32, i32) {
    %c0_i32 = arith.constant 0 : i32
    %c0_i32_0 = arith.constant 0 : i32
    %c0_i32_1 = arith.constant 0 : i32
    return %c0_i32, %c0_i32_0 : i32, i32
  }
  func.func @transform_4(%arg0: i32) -> (i32, i32) {
    %c0_i32 = arith.constant 0 : i32
    %c0_i32_0 = arith.constant 0 : i32
    %c0_i32_1 = arith.constant 0 : i32
    return %c0_i32, %c0_i32_0 : i32, i32
  }
  func.func @transform_5(%arg0: i32) -> (i32, i32) {
    %c0_i32 = arith.constant 0 : i32
    %c0_i32_0 = arith.constant 0 : i32
    %c0_i32_1 = arith.constant 0 : i32
    return %c0_i32, %c0_i32_0 : i32, i32
  }
  func.func @transform_6(%arg0: i32) -> (i32, i32) {
    %c0_i32 = arith.constant 0 : i32
    %c0_i32_0 = arith.constant 0 : i32
    %c0_i32_1 = arith.constant 0 : i32
    return %c0_i32, %c0_i32_0 : i32, i32
  }
  func.func @transform_7(%arg0: i32) -> (i32, i32) {
    %c0_i32 = arith.constant 0 : i32
    %c0_i32_0 = arith.constant 0 : i32
    %c0_i32_1 = arith.constant 0 : i32
    return %c0_i32, %c0_i32_0 : i32, i32
  }
  func.func @transform_8(%arg0: i32) -> (i32, i32) {
    %c0_i32 = arith.constant 0 : i32
    %c0_i32_0 = arith.constant 0 : i32
    %c0_i32_1 = arith.constant 0 : i32
    return %c0_i32, %c0_i32_0 : i32, i32
  }
  func.func @transform_9(%arg0: i32) -> (i32, i32) {
    %c0_i32 = arith.constant 0 : i32
    %c0_i32_0 = arith.constant 0 : i32
    %c0_i32_1 = arith.constant 0 : i32
    return %c0_i32, %c0_i32_0 : i32, i32
  }
  func.func @transform_10(%arg0: i32) -> (i32, i32) {
    %c0_i32 = arith.constant 0 : i32
    %c0_i32_0 = arith.constant 0 : i32
    %c0_i32_1 = arith.constant 0 : i32
    return %c0_i32, %c0_i32_0 : i32, i32
  }
  func.func @transform_11(%arg0: i32) -> (i32, i32) {
    %c0_i32 = arith.constant 0 : i32
    %c0_i32_0 = arith.constant 0 : i32
    %c0_i32_1 = arith.constant 0 : i32
    return %c0_i32, %c0_i32_0 : i32, i32
  }
  func.func @transform_12(%arg0: i32) -> (i32, i32) {
    %c0_i32 = arith.constant 0 : i32
    %c0_i32_0 = arith.constant 0 : i32
    %c0_i32_1 = arith.constant 0 : i32
    return %c0_i32, %c0_i32_0 : i32, i32
  }
  func.func @transform_13(%arg0: i32) -> (i32, i32) {
    %c0_i32 = arith.constant 0 : i32
    %c0_i32_0 = arith.constant 0 : i32
    %c0_i32_1 = arith.constant 0 : i32
    return %c0_i32, %c0_i32_0 : i32, i32
  }
}

</mosaic_0001>

<llo_original>
// kernel: tpu_custom_call.1
$region0: #{tpu_custom_call.1}
  #allocation0 [shape = 'u32[]', space=smem, size = 0x4, offset = 0x4, fixed_abs, tag = 'smem constant byte address 0x4 - core index']
  #allocation1 [shape = 'u32[144,128]{1,0:T(1,128)}', space=vmem, size = 0x12000, scoped, tag = 'internal scratch']
  #allocation2 [shape = 'f32[36,32]{1,0:T(8,128)}', space=vmem, size = 0x5000, scoped, tag = 'scratch operand']
  #allocation3 [shape = 'f32[20,32]{1,0:T(8,128)}', space=vmem, size = 0x3000, scoped, tag = 'scratch operand']
  #allocation4 [shape = 'f32[12,32]{1,0:T(8,128)}', space=vmem, size = 0x2000, scoped, tag = 'scratch operand']
  %s0 = inlined_call_operand.vmem [shape: f32[36,16], index: 0, kind: input, shape index: {}]
  %s1 = inlined_call_operand.vmem [shape: f32[48,32], index: 1, kind: input, shape index: {}]
  %s2 = inlined_call_operand.vmem [shape: f32[1,32], index: 2, kind: input, shape index: {}]
  %s3 = inlined_call_operand.vmem [shape: f32[1,32], index: 3, kind: input, shape index: {}]
  %s4 = inlined_call_operand.vmem [shape: f32[128,64], index: 4, kind: input, shape index: {}]
  %s5 = inlined_call_operand.vmem [shape: f32[1,32], index: 5, kind: input, shape index: {}]
  %s6 = inlined_call_operand.vmem [shape: f32[1,32], index: 6, kind: input, shape index: {}]
  %s7 = inlined_call_operand.vmem [shape: f32[128,64], index: 7, kind: input, shape index: {}]
  %s8 = inlined_call_operand.vmem [shape: f32[1,32], index: 8, kind: input, shape index: {}]
  %s9 = inlined_call_operand.vmem [shape: f32[1,32], index: 9, kind: input, shape index: {}]
  %s10 = inlined_call_operand.vmem [shape: f32[128,64], index: 10, kind: input, shape index: {}]
  %s11 = inlined_call_operand.vmem [shape: f32[1,32], index: 11, kind: input, shape index: {}]
  %s12 = inlined_call_operand.vmem [shape: f32[1,32], index: 12, kind: input, shape index: {}]
  %s13 = inlined_call_operand.hbm [shape: f32[4,32], index: 13, kind: output, shape index: {}]
  %s14 = sld [smem:[#allocation0]]
  $region62: #{tpu_custom_call.1} parent=0
    _
  %s16 = ssub.s32 1, %s14
  %s17 = scalar_select 0, %s16, %s14
  $region1: #{tpu_custom_call.1} parent=0
    #allocation5 [shape = 'u8[2048]{0}', space=vmem, size = 0x800, scoped, tag = 'output window, operand 0, single buffered']
    #allocation6 [shape = 's32[1]{0}', space=sflag, size = 0x4, scoped, tag = 'scoped memory for tpu_custom_call.1']
    %18 = vsyncpa [#allocation6], 0
    // Predicated region
    $region2: #{tpu_custom_call.1} parent=1 // pred_check
      _
    $region3: #{tpu_custom_call.1} parent=1 // pred_check_branch
      %20 = sbr.rel (0) target = $region5
    $region4: #{tpu_custom_call.1} parent=1 // pred_region
      _
    $region5: #{tpu_custom_call.1} parent=1 // pred_fallthru
      _
    // Predicated region
    $region6: #{tpu_custom_call.1} parent=1 // pred_check
      _
    $region7: #{tpu_custom_call.1} parent=1 // pred_check_branch
      %22 = sbr.rel (0) target = $region9
    $region8: #{tpu_custom_call.1} parent=1 // pred_region
      _
    $region9: #{tpu_custom_call.1} parent=1 // pred_fallthru
      _
    // Predicated region
    $region10: #{tpu_custom_call.1} parent=1 // pred_check
      _
    $region11: #{tpu_custom_call.1} parent=1 // pred_check_branch
      %24 = sbr.rel (0) target = $region13
    $region12: #{tpu_custom_call.1} parent=1 // pred_region
      _
    $region13: #{tpu_custom_call.1} parent=1 // pred_fallthru
      _
    // Predicated region
    $region14: #{tpu_custom_call.1} parent=1 // pred_check
      _
    $region15: #{tpu_custom_call.1} parent=1 // pred_check_branch
      %26 = sbr.rel (0) target = $region17
    $region16: #{tpu_custom_call.1} parent=1 // pred_region
      _
    $region17: #{tpu_custom_call.1} parent=1 // pred_fallthru
      _
    // Predicated region
    $region18: #{tpu_custom_call.1} parent=1 // pred_check
      _
    $region19: #{tpu_custom_call.1} parent=1 // pred_check_branch
      %28 = sbr.rel (0) target = $region21
    $region20: #{tpu_custom_call.1} parent=1 // pred_region
      _
    $region21: #{tpu_custom_call.1} parent=1 // pred_fallthru
      _
    // Predicated region
    $region22: #{tpu_custom_call.1} parent=1 // pred_check
      _
    $region23: #{tpu_custom_call.1} parent=1 // pred_check_branch
      %30 = sbr.rel (0) target = $region25
    $region24: #{tpu_custom_call.1} parent=1 // pred_region
      _
    $region25: #{tpu_custom_call.1} parent=1 // pred_fallthru
      _
    // Predicated region
    $region26: #{tpu_custom_call.1} parent=1 // pred_check
      _
    $region27: #{tpu_custom_call.1} parent=1 // pred_check_branch
      %32 = sbr.rel (0) target = $region29
    $region28: #{tpu_custom_call.1} parent=1 // pred_region
      _
    $region29: #{tpu_custom_call.1} parent=1 // pred_fallthru
      _
    // Predicated region
    $region30: #{tpu_custom_call.1} parent=1 // pred_check
      _
    $region31: #{tpu_custom_call.1} parent=1 // pred_check_branch
      %34 = sbr.rel (0) target = $region33
    $region32: #{tpu_custom_call.1} parent=1 // pred_region
      _
    $region33: #{tpu_custom_call.1} parent=1 // pred_fallthru
      _
    // Predicated region
    $region34: #{tpu_custom_call.1} parent=1 // pred_check
      _
    $region35: #{tpu_custom_call.1} parent=1 // pred_check_branch
      %36 = sbr.rel (0) target = $region37
    $region36: #{tpu_custom_call.1} parent=1 // pred_region
      _
    $region37: #{tpu_custom_call.1} parent=1 // pred_fallthru
      _
    // Predicated region
    $region38: #{tpu_custom_call.1} parent=1 // pred_check
      _
    $region39: #{tpu_custom_call.1} parent=1 // pred_check_branch
      %38 = sbr.rel (0) target = $region41
    $region40: #{tpu_custom_call.1} parent=1 // pred_region
      _
    $region41: #{tpu_custom_call.1} parent=1 // pred_fallthru
      _
    // Predicated region
    $region42: #{tpu_custom_call.1} parent=1 // pred_check
      _
    $region43: #{tpu_custom_call.1} parent=1 // pred_check_branch
      %40 = sbr.rel (0) target = $region45
    $region44: #{tpu_custom_call.1} parent=1 // pred_region
      _
    $region45: #{tpu_custom_call.1} parent=1 // pred_fallthru
      _
    // Predicated region
    $region46: #{tpu_custom_call.1} parent=1 // pred_check
      _
    $region47: #{tpu_custom_call.1} parent=1 // pred_check_branch
      %42 = sbr.rel (0) target = $region49
    $region48: #{tpu_custom_call.1} parent=1 // pred_region
      _
    $region49: #{tpu_custom_call.1} parent=1 // pred_fallthru
      _
    // Predicated region
    $region50: #{tpu_custom_call.1} parent=1 // pred_check
      _
    $region51: #{tpu_custom_call.1} parent=1 // pred_check_branch
      %44 = sbr.rel (0) target = $region53
    $region52: #{tpu_custom_call.1} parent=1 // pred_region
      _
    $region53: #{tpu_custom_call.1} parent=1 // pred_fallthru
      _
    %vm45 = vcmask 253952
    %46 = vst.msk [vmem:[#allocation2] sm:$0x1] %vm45, 0.0
    %47 = vst.msk [vmem:[#allocation2 + $0x11] sm:$0x1] %vm45, 0.0
    %48 = vst.msk [vmem:[#allocation2 + $0x12] sm:$0x1] %vm45, 0.0
    %49 = vst.msk [vmem:[#allocation2 + $0x23] sm:$0x1] %vm45, 0.0
    %50 = vst.msk [vmem:[#allocation3] sm:$0x1] %vm45, 0.0
    %51 = vst.msk [vmem:[#allocation3 + $0x9] sm:$0x1] %vm45, 0.0
    %52 = vst.msk [vmem:[#allocation3 + $0xa] sm:$0x1] %vm45, 0.0
    %53 = vst.msk [vmem:[#allocation3 + $0x13] sm:$0x1] %vm45, 0.0
    %54 = vst.msk [vmem:[#allocation4] sm:$0x1] %vm45, 0.0
    %55 = vst.msk [vmem:[#allocation4 + $0x5] sm:$0x1] %vm45, 0.0
    %56 = vst.msk [vmem:[#allocation4 + $0x6] sm:$0x1] %vm45, 0.0
    %57 = vst.msk [vmem:[#allocation4 + $0xb] sm:$0x1] %vm45, 0.0
    %v58 = vld [vmem:[%s0] sm:$0xff]
    %v59 = vld [vmem:[%s0 + $0x8] sm:$0xff]
    %v60 = vld [vmem:[%s0 + $0x10] sm:$0xff]
    %v61 = vld [vmem:[%s0 + $0x18] sm:$0xff]
    %v62 = vld [vmem:[%s0 + $0x20] sm:$0x3]
    %v63 = vld [vmem:[%s1] sm:$0xff]
    %v64 = vld [vmem:[%s1 + $0x8] sm:$0xff]
    %v65 = vld [vmem:[%s0 + $0x1] sm:$0xff]
    %v66 = vld [vmem:[%s0 + $0x9] sm:$0xff]
    %v67 = vld [vmem:[%s0 + $0x11] sm:$0xff]
    %v68 = vld [vmem:[%s0 + $0x19] sm:$0xff]
    %v69 = vld [vmem:[%s0 + $0x21] sm:$0x3]
    %v70 = vld [vmem:[%s1 + $0x10] sm:$0xff]
    %v71 = vld [vmem:[%s1 + $0x18] sm:$0xff]
    %vm72 = vcmask 130048
    %v74 = vsel %vm72, %v65, 0
    %v77 = vsel %vm72, %v66, 0
    %v80 = vsel %vm72, %v67, 0
    %v83 = vsel %vm72, %v68, 0
    %v86 = vsel %vm72, %v69, 0
    %88 = vmatprep.subr.mxu0 0.0
    %89 = vmatpush1.msra.mxu0 0.0
    %90 = vmatprep.subr.mxu0 0.0
    %91 = vmatpush1.msra.mxu0 0.0
    %92 = vmatprep.subr.mxu0 0.0
    %93 = vmatpush1.msra.mxu0 0.0
    %94 = vmatprep.subr.mxu0 0.0
    %95 = vmatpush1.msra.mxu0 0.0
    %96 = vmatprep.subr.mxu0 0.0
    %97 = vmatpush1.msra.mxu0 0.0
    %98 = vmatprep.subr.mxu0 0.0
    %99 = vmatpush1.msra.mxu0 0.0
    %100 = vmatprep.subr.mxu0 0.0
    %101 = vmatpush1.msra.mxu0 0.0
    %102 = vmatprep.subr.mxu0 0.0
    %103 = vmatpush1.msra.mxu0 0.0
    %104 = vmatprep.subr.mxu0 0.0
    %105 = vmatpush1.msra.mxu0 0.0
    %106 = vmatprep.subr.mxu0 0.0
    %107 = vmatpush1.msra.mxu0 0.0
    %108 = vmatprep.subr.mxu0 0.0
    %109 = vmatpush1.msra.mxu0 0.0
    %110 = vmatprep.subr.mxu0 0.0
    %111 = vmatpush1.msra.mxu0 0.0
    %112 = vmatprep.subr.mxu0 0.0
    %113 = vmatpush1.msra.mxu0 0.0
    %114 = vmatprep.subr.mxu0 0.0
    %115 = vmatpush1.msra.mxu0 0.0
    %116 = vmatprep.subr.mxu0 0.0
    %117 = vmatpush1.msra.mxu0 %v71
    %118 = vmatprep.subr.mxu0 0.0
    %119 = vmatpush1.msra.mxu0 %v70
    %120 = vmatprep.subr.mxu0 0.0
    %121 = vmatpush2.msra.mxu0 0.0
    %122 = vmatprep.subr.mxu0 0.0
    %123 = vmatpush2.msra.mxu0 0.0
    %124 = vmatprep.subr.mxu0 0.0
    %125 = vmatpush2.msra.mxu0 0.0
    %126 = vmatprep.subr.mxu0 0.0
    %127 = vmatpush2.msra.mxu0 0.0
    %128 = vmatprep.subr.mxu0 0.0
    %129 = vmatpush2.msra.mxu0 0.0
    %130 = vmatprep.subr.mxu0 0.0
    %131 = vmatpush2.msra.mxu0 0.0
    %132 = vmatprep.subr.mxu0 0.0
    %133 = vmatpush2.msra.mxu0 0.0
    %134 = vmatprep.subr.mxu0 0.0
    %135 = vmatpush2.msra.mxu0 0.0
    %136 = vmatprep.subr.mxu0 0.0
    %137 = vmatpush2.msra.mxu0 0.0
    %138 = vmatprep.subr.mxu0 0.0
    %139 = vmatpush2.msra.mxu0 0.0
    %140 = vmatprep.subr.mxu0 0.0
    %141 = vmatpush2.msra.mxu0 0.0
    %142 = vmatprep.subr.mxu0 0.0
    %143 = vmatpush2.msra.mxu0 0.0
    %144 = vmatprep.subr.mxu0 0.0
    %145 = vmatpush2.msra.mxu0 0.0
    %146 = vmatprep.subr.mxu0 0.0
    %147 = vmatpush2.msra.mxu0 0.0
    %148 = vmatprep.subr.mxu0 0.0
    %149 = vmatpush2.msra.mxu0 0.0
    %150 = vmatprep.subr.mxu0 0.0
    %151 = vmatpush2.msra.mxu0 0.0
    %152 = vmatprep.mubr.f32.mxu0 0.0
    %153 = vmatmul.mubr.f32.gmra.mxu0 %v74
    %v154 = vpop.f32.mrf.mxu0
    %v155 = vadd.f32 0.0, %v154
    %v156 = vpop.f32.mrf.mxu0
    %157 = vmatprep.mubr.f32.mxu0 0.0
    %158 = vmatmul.mubr.f32.gmra.mxu0 %v77
    %v159 = vpop.f32.mrf.mxu0
    %v160 = vadd.f32 0.0, %v159
    %v161 = vpop.f32.mrf.mxu0
    %162 = vmatprep.mubr.f32.mxu0 0.0
    %163 = vmatmul.mubr.f32.gmra.mxu0 %v80
    %v164 = vpop.f32.mrf.mxu0
    %v165 = vadd.f32 0.0, %v164
    %v166 = vpop.f32.mrf.mxu0
    %167 = vmatprep.mubr.f32.mxu0 0.0
    %168 = vmatmul.mubr.f32.gmra.mxu0 %v83
    %v169 = vpop.f32.mrf.mxu0
    %v170 = vadd.f32 0.0, %v169
    %v171 = vpop.f32.mrf.mxu0
    %172 = vmatprep.mubr.f32.mxu0 0.0
    %173 = vmatmul.mubr.f32.gmra.mxu0 %v86
    %v174 = vpop.f32.mrf.mxu0
    %v175 = vadd.f32 0.0, %v174
    %v176 = vpop.f32.mrf.mxu0
    %177 = vdwg.mxu0
    %v179 = vsel %vm72, %v58, 0
    %v182 = vsel %vm72, %v59, 0
    %v185 = vsel %vm72, %v60, 0
    %v188 = vsel %vm72, %v61, 0
    %v191 = vsel %vm72, %v62, 0
    %193 = vmatprep.subr.mxu0 0.0
    %194 = vmatpush1.msra.mxu0 0.0
    %195 = vmatprep.subr.mxu0 0.0
    %196 = vmatpush1.msra.mxu0 0.0
    %197 = vmatprep.subr.mxu0 0.0
    %198 = vmatpush1.msra.mxu0 0.0
    %199 = vmatprep.subr.mxu0 0.0
    %200 = vmatpush1.msra.mxu0 0.0
    %201 = vmatprep.subr.mxu0 0.0
    %202 = vmatpush1.msra.mxu0 0.0
    %203 = vmatprep.subr.mxu0 0.0
    %204 = vmatpush1.msra.mxu0 0.0
    %205 = vmatprep.subr.mxu0 0.0
    %206 = vmatpush1.msra.mxu0 0.0
    %207 = vmatprep.subr.mxu0 0.0
    %208 = vmatpush1.msra.mxu0 0.0
    %209 = vmatprep.subr.mxu0 0.0
    %210 = vmatpush1.msra.mxu0 0.0
    %211 = vmatprep.subr.mxu0 0.0
    %212 = vmatpush1.msra.mxu0 0.0
    %213 = vmatprep.subr.mxu0 0.0
    %214 = vmatpush1.msra.mxu0 0.0
    %215 = vmatprep.subr.mxu0 0.0
    %216 = vmatpush1.msra.mxu0 0.0
    %217 = vmatprep.subr.mxu0 0.0
    %218 = vmatpush1.msra.mxu0 0.0
    %219 = vmatprep.subr.mxu0 0.0
    %220 = vmatpush1.msra.mxu0 0.0
    %221 = vmatprep.subr.mxu0 0.0
    %222 = vmatpush1.msra.mxu0 %v64
    %223 = vmatprep.subr.mxu0 0.0
    %224 = vmatpush1.msra.mxu0 %v63
    %225 = vmatprep.subr.mxu0 0.0
    %226 = vmatpush2.msra.mxu0 0.0
    %227 = vmatprep.subr.mxu0 0.0
    %228 = vmatpush2.msra.mxu0 0.0
    %229 = vmatprep.subr.mxu0 0.0
    %230 = vmatpush2.msra.mxu0 0.0
    %231 = vmatprep.subr.mxu0 0.0
    %232 = vmatpush2.msra.mxu0 0.0
    %233 = vmatprep.subr.mxu0 0.0
    %234 = vmatpush2.msra.mxu0 0.0
    %235 = vmatprep.subr.mxu0 0.0
    %236 = vmatpush2.msra.mxu0 0.0
    %237 = vmatprep.subr.mxu0 0.0
    %238 = vmatpush2.msra.mxu0 0.0
    %239 = vmatprep.subr.mxu0 0.0
    %240 = vmatpush2.msra.mxu0 0.0
    %241 = vmatprep.subr.mxu0 0.0
    %242 = vmatpush2.msra.mxu0 0.0
    %243 = vmatprep.subr.mxu0 0.0
    %244 = vmatpush2.msra.mxu0 0.0
    %245 = vmatprep.subr.mxu0 0.0
    %246 = vmatpush2.msra.mxu0 0.0
    %247 = vmatprep.subr.mxu0 0.0
    %248 = vmatpush2.msra.mxu0 0.0
    %249 = vmatprep.subr.mxu0 0.0
    %250 = vmatpush2.msra.mxu0 0.0
    %251 = vmatprep.subr.mxu0 0.0
    %252 = vmatpush2.msra.mxu0 0.0
    %253 = vmatprep.subr.mxu0 0.0
    %254 = vmatpush2.msra.mxu0 0.0
    %255 = vmatprep.subr.mxu0 0.0
    %256 = vmatpush2.msra.mxu0 0.0
    %257 = vmatprep.mubr.f32.mxu0 0.0
    %258 = vmatmul.mubr.f32.gmra.mxu0 %v179
    %v259 = vpop.f32.mrf.mxu0
    %v260 = vadd.f32 %v155, %v259
    %v261 = vpop.f32.mrf.mxu0
    %262 = vmatprep.mubr.f32.mxu0 0.0
    %263 = vmatmul.mubr.f32.gmra.mxu0 %v182
    %v264 = vpop.f32.mrf.mxu0
    %v265 = vadd.f32 %v160, %v264
    %v266 = vpop.f32.mrf.mxu0
    %267 = vmatprep.mubr.f32.mxu0 0.0
    %268 = vmatmul.mubr.f32.gmra.mxu0 %v185
    %v269 = vpop.f32.mrf.mxu0
    %v270 = vadd.f32 %v165, %v269
    %v271 = vpop.f32.mrf.mxu0
    %272 = vmatprep.mubr.f32.mxu0 0.0
    %273 = vmatmul.mubr.f32.gmra.mxu0 %v188
    %v274 = vpop.f32.mrf.mxu0
    %v275 = vadd.f32 %v170, %v274
    %v276 = vpop.f32.mrf.mxu0
    %277 = vmatprep.mubr.f32.mxu0 0.0
    %278 = vmatmul.mubr.f32.gmra.mxu0 %v191
    %v279 = vpop.f32.mrf.mxu0
    %v280 = vadd.f32 %v175, %v279
    %v281 = vpop.f32.mrf.mxu0
    %282 = vdwg.mxu0
    %v283 = vld [vmem:[%s0 + $0x2] sm:$0xff]
    %v284 = vld [vmem:[%s0 + $0xa] sm:$0xff]
    %v285 = vld [vmem:[%s0 + $0x12] sm:$0xff]
    %v286 = vld [vmem:[%s0 + $0x1a] sm:$0xff]
    %v287 = vld [vmem:[%s0 + $0x22] sm:$0x3]
    %v288 = vld [vmem:[%s1 + $0x20] sm:$0xff]
    %v289 = vld [vmem:[%s1 + $0x28] sm:$0xff]
    %v291 = vsel %vm72, %v283, 0
    %v294 = vsel %vm72, %v284, 0
    %v297 = vsel %vm72, %v285, 0
    %v300 = vsel %vm72, %v286, 0
    %v303 = vsel %vm72, %v287, 0
    %305 = vmatprep.subr.mxu0 0.0
    %306 = vmatpush1.msra.mxu0 0.0
    %307 = vmatprep.subr.mxu0 0.0
    %308 = vmatpush1.msra.mxu0 0.0
    %309 = vmatprep.subr.mxu0 0.0
    %310 = vmatpush1.msra.mxu0 0.0
    %311 = vmatprep.subr.mxu0 0.0
    %312 = vmatpush1.msra.mxu0 0.0
    %313 = vmatprep.subr.mxu0 0.0
    %314 = vmatpush1.msra.mxu0 0.0
    %315 = vmatprep.subr.mxu0 0.0
    %316 = vmatpush1.msra.mxu0 0.0
    %317 = vmatprep.subr.mxu0 0.0
    %318 = vmatpush1.msra.mxu0 0.0
    %319 = vmatprep.subr.mxu0 0.0
    %320 = vmatpush1.msra.mxu0 0.0
    %321 = vmatprep.subr.mxu0 0.0
    %322 = vmatpush1.msra.mxu0 0.0
    %323 = vmatprep.subr.mxu0 0.0
    %324 = vmatpush1.msra.mxu0 0.0
    %325 = vmatprep.subr.mxu0 0.0
    %326 = vmatpush1.msra.mxu0 0.0
    %327 = vmatprep.subr.mxu0 0.0
    %328 = vmatpush1.msra.mxu0 0.0
    %329 = vmatprep.subr.mxu0 0.0
    %330 = vmatpush1.msra.mxu0 0.0
    %331 = vmatprep.subr.mxu0 0.0
    %332 = vmatpush1.msra.mxu0 0.0
    %333 = vmatprep.subr.mxu0 0.0
    %334 = vmatpush1.msra.mxu0 %v289
    %335 = vmatprep.subr.mxu0 0.0
    %336 = vmatpush1.msra.mxu0 %v288
    %337 = vmatprep.subr.mxu0 0.0
    %338 = vmatpush2.msra.mxu0 0.0
    %339 = vmatprep.subr.mxu0 0.0
    %340 = vmatpush2.msra.mxu0 0.0
    %341 = vmatprep.subr.mxu0 0.0
    %342 = vmatpush2.msra.mxu0 0.0
    %343 = vmatprep.subr.mxu0 0.0
    %344 = vmatpush2.msra.mxu0 0.0
    %345 = vmatprep.subr.mxu0 0.0
    %346 = vmatpush2.msra.mxu0 0.0
    %347 = vmatprep.subr.mxu0 0.0
    %348 = vmatpush2.msra.mxu0 0.0
    %349 = vmatprep.subr.mxu0 0.0
    %350 = vmatpush2.msra.mxu0 0.0
    %351 = vmatprep.subr.mxu0 0.0
    %352 = vmatpush2.msra.mxu0 0.0
    %353 = vmatprep.subr.mxu0 0.0
    %354 = vmatpush2.msra.mxu0 0.0
    %355 = vmatprep.subr.mxu0 0.0
    %356 = vmatpush2.msra.mxu0 0.0
    %357 = vmatprep.subr.mxu0 0.0
    %358 = vmatpush2.msra.mxu0 0.0
    %359 = vmatprep.subr.mxu0 0.0
    %360 = vmatpush2.msra.mxu0 0.0
    %361 = vmatprep.subr.mxu0 0.0
    %362 = vmatpush2.msra.mxu0 0.0
    %363 = vmatprep.subr.mxu0 0.0
    %364 = vmatpush2.msra.mxu0 0.0
    %365 = vmatprep.subr.mxu0 0.0
    %366 = vmatpush2.msra.mxu0 0.0
    %367 = vmatprep.subr.mxu0 0.0
    %368 = vmatpush2.msra.mxu0 0.0
    %369 = vmatprep.mubr.f32.mxu0 0.0
    %370 = vmatmul.mubr.f32.gmra.mxu0 %v291
    %v371 = vpop.f32.mrf.mxu0
    %v372 = vadd.f32 0.0, %v371
    %v373 = vpop.f32.mrf.mxu0
    %374 = vmatprep.mubr.f32.mxu0 0.0
    %375 = vmatmul.mubr.f32.gmra.mxu0 %v294
    %v376 = vpop.f32.mrf.mxu0
    %v377 = vadd.f32 0.0, %v376
    %v378 = vpop.f32.mrf.mxu0
    %379 = vmatprep.mubr.f32.mxu0 0.0
    %380 = vmatmul.mubr.f32.gmra.mxu0 %v297
    %v381 = vpop.f32.mrf.mxu0
    %v382 = vadd.f32 0.0, %v381
    %v383 = vpop.f32.mrf.mxu0
    %384 = vmatprep.mubr.f32.mxu0 0.0
    %385 = vmatmul.mubr.f32.gmra.mxu0 %v300
    %v386 = vpop.f32.mrf.mxu0
    %v387 = vadd.f32 0.0, %v386
    %v388 = vpop.f32.mrf.mxu0
    %389 = vmatprep.mubr.f32.mxu0 0.0
    %390 = vmatmul.mubr.f32.gmra.mxu0 %v303
    %v391 = vpop.f32.mrf.mxu0
    %v392 = vadd.f32 0.0, %v391
    %v393 = vpop.f32.mrf.mxu0
    %394 = vdwg.mxu0
    %v395 = vadd.f32 %v260, %v372
    %v396 = vadd.f32 %v265, %v377
    %v397 = vadd.f32 %v270, %v382
    %v398 = vadd.f32 %v275, %v387
    %v399 = vadd.f32 %v280, %v392
    %v400 = vld [vmem:[%s2] sm:$0x1]
    %v401 = vld [vmem:[%s3] sm:$0x1]
    %vm402 = vcmask 261120
    %v403 = vsel %vm402, %v395, 0.0
    %v404 = vsel %vm402, %v396, 0.0
    %v405 = vadd.f32 %v403, %v404
    %v406 = vrot.slane %v405, 4
    %v407 = vadd.f32 %v405, %v406
    %v408 = vrot.slane %v407, 2
    %v409 = vadd.f32 %v407, %v408
    %v410 = vrot.slane %v409, 1
    %v411 = vadd.f32 %v409, %v410
    %v412 = vadd.f32 %v411, 0.0
    %vm416 = vcmask 1045504
    %v417 = vrot.slane %v397, 2
    %v418 = vrot.slane %v398, 2
    %v419 = vsel %vm416, %v417, %v418
    %v420 = vrot.slane %v399, 2
    %v421 = vsel %vm416, %v418, %v420
    %v424 = vsel %vm402, %v419, 0.0
    %v425 = vsel %vm402, %v421, 0.0
    %v426 = vadd.f32 %v424, %v425
    %v427 = vrot.slane %v426, 4
    %v428 = vadd.f32 %v426, %v427
    %v429 = vrot.slane %v428, 2
    %v430 = vadd.f32 %v428, %v429
    %v431 = vrot.slane %v430, 1
    %v432 = vadd.f32 %v430, %v431
    %v433 = vadd.f32 %v412, %v432
    %v434 = vrcp.pop 32.0
    %v435 = vmul.f32 %v433, %v434
    %v436 = vsub.f32 %v395, %v435
    %v437 = vsub.f32 %v396, %v435
    %v438 = vmul.f32 %v436, %v436
    %v439 = vmul.f32 %v437, %v437
    %v440 = vsel %vm402, %v438, 0.0
    %v441 = vsel %vm402, %v439, 0.0
    %v442 = vadd.f32 %v440, %v441
    %v443 = vrot.slane %v442, 4
    %v444 = vadd.f32 %v442, %v443
    %v445 = vrot.slane %v444, 2
    %v446 = vadd.f32 %v444, %v445
    %v447 = vrot.slane %v446, 1
    %v448 = vadd.f32 %v446, %v447
    %v449 = vadd.f32 %v448, 0.0
    %v450 = vsub.f32 %v397, %v435
    %v451 = vsub.f32 %v398, %v435
    %v452 = vsub.f32 %v399, %v435
    %v453 = vmul.f32 %v450, %v450
    %v454 = vmul.f32 %v451, %v451
    %v455 = vmul.f32 %v452, %v452
    %v459 = vrot.slane %v453, 2
    %v460 = vrot.slane %v454, 2
    %v461 = vsel %vm416, %v459, %v460
    %v462 = vrot.slane %v455, 2
    %v463 = vsel %vm416, %v460, %v462
    %v466 = vsel %vm402, %v461, 0.0
    %v467 = vsel %vm402, %v463, 0.0
    %v468 = vadd.f32 %v466, %v467
    %v469 = vrot.slane %v468, 4
    %v470 = vadd.f32 %v468, %v469
    %v471 = vrot.slane %v470, 2
    %v472 = vadd.f32 %v470, %v471
    %v473 = vrot.slane %v472, 1
    %v474 = vadd.f32 %v472, %v473
    %v475 = vadd.f32 %v449, %v474
    %v476 = vmul.f32 %v475, %v434
    %v477 = vadd.f32 %v476, 1e-05
    %v478 = vrsqrt.pop %v477
    %v479 = vmul.f32 %v400, %v478
    %v480 = vmul.f32 %v435, %v479
    %v481 = vsub.f32 %v401, %v480
    %v483 = vlaneseq
    %v484 = vshrl.u32 %v483, 7
    %v485 = vsub.s32 0, %v484
    %v486 = vrot.slane %v479, %v485
    %v488 = vmul.f32 %v395, %v486
    %v489 = vmul.f32 %v396, %v486
    %v491 = vlaneseq
    %v492 = vshrl.u32 %v491, 7
    %v493 = vsub.s32 0, %v492
    %v494 = vrot.slane %v481, %v493
    %v496 = vadd.f32 %v488, %v494
    %v497 = vadd.f32 %v489, %v494
    %vm498 = vcmp.ge.f32.partialorder %v496, 0.0
    %vm499 = vcmp.ge.f32.partialorder %v497, 0.0
    %v500 = vmul.f32 %v496, 0.2
    %v501 = vmul.f32 %v497, 0.2
    %v502 = vsel %vm498, %v496, %v500
    %v503 = vsel %vm499, %v497, %v501
    %v504 = vmul.f32 %v397, %v486
    %v505 = vmul.f32 %v398, %v486
    %v506 = vmul.f32 %v399, %v486
    %v507 = vadd.f32 %v504, %v494
    %v508 = vadd.f32 %v505, %v494
    %v509 = vadd.f32 %v506, %v494
    %vm510 = vcmp.ge.f32.partialorder %v507, 0.0
    %vm511 = vcmp.ge.f32.partialorder %v508, 0.0
    %vm512 = vcmp.ge.f32.partialorder %v509, 0.0
    %v513 = vmul.f32 %v507, 0.2
    %v514 = vmul.f32 %v508, 0.2
    %v515 = vmul.f32 %v509, 0.2
    %v516 = vsel %vm510, %v507, %v513
    %v517 = vsel %vm511, %v508, %v514
    %v518 = vsel %vm512, %v509, %v515
    %519 = vst.msk [vmem:[#allocation2 + $0x1] sm:$0xff] %vm402, %v502
    %520 = vst.msk [vmem:[#allocation2 + $0x9] sm:$0xff] %vm402, %v503
    %vm521 = vcmask 261122
    %522 = vst.msk [vmem:[#allocation2 + $0x11] sm:$0xfc] %vm521, %v516
    %523 = vst.msk [vmem:[#allocation2 + $0x19] sm:$0xff] %vm402, %v517
    %vm524 = vcmask 254976
    %525 = vst.msk [vmem:[#allocation2 + $0x21] sm:$0x3] %vm524, %v518
    %v526 = vld [vmem:[#allocation2] ss:$2 sm:$0xff]
    %s527 = scalar_lea.vmem [#allocation2], 16
    %v528 = vld [vmem:[%s527] ss:$2 sm:$0xff]
    %s529 = scalar_lea.vmem [#allocation2], 32
    %v530 = vld [vmem:[%s529] ss:$2 sm:$0x1]
    %v531 = vld [vmem:[%s4] sm:$0xff]
    %v532 = vld [vmem:[%s4 + $0x8] sm:$0xff]
    %v533 = vld [vmem:[%s4 + $0x10] sm:$0xff]
    %v534 = vld [vmem:[%s4 + $0x18] sm:$0xff]
    %s535 = scalar_lea.vmem [#allocation2], 1
    %v536 = vld [vmem:[%s535] ss:$2 sm:$0xff]
    %s537 = scalar_lea.vmem [#allocation2], 17
    %v538 = vld [vmem:[%s537] ss:$2 sm:$0xff]
    %s539 = scalar_lea.vmem [#allocation2], 33
    %v540 = vld [vmem:[%s539] ss:$2 sm:$0x1]
    %v541 = vld [vmem:[%s4 + $0x20] sm:$0xff]
    %v542 = vld [vmem:[%s4 + $0x28] sm:$0xff]
    %v543 = vld [vmem:[%s4 + $0x30] sm:$0xff]
    %v544 = vld [vmem:[%s4 + $0x38] sm:$0xff]
    %v546 = vsel %vm402, %v536, 0
    %v549 = vsel %vm402, %v538, 0
    %v552 = vsel %vm402, %v540, 0
    %554 = vmatprep.subr.mxu0 0.0
    %555 = vmatpush1.msra.mxu0 0.0
    %556 = vmatprep.subr.mxu0 0.0
    %557 = vmatpush1.msra.mxu0 0.0
    %558 = vmatprep.subr.mxu0 0.0
    %559 = vmatpush1.msra.mxu0 0.0
    %560 = vmatprep.subr.mxu0 0.0
    %561 = vmatpush1.msra.mxu0 0.0
    %562 = vmatprep.subr.mxu0 0.0
    %563 = vmatpush1.msra.mxu0 0.0
    %564 = vmatprep.subr.mxu0 0.0
    %565 = vmatpush1.msra.mxu0 0.0
    %566 = vmatprep.subr.mxu0 0.0
    %567 = vmatpush1.msra.mxu0 0.0
    %568 = vmatprep.subr.mxu0 0.0
    %569 = vmatpush1.msra.mxu0 0.0
    %570 = vmatprep.subr.mxu0 0.0
    %571 = vmatpush1.msra.mxu0 0.0
    %572 = vmatprep.subr.mxu0 0.0
    %573 = vmatpush1.msra.mxu0 0.0
    %574 = vmatprep.subr.mxu0 0.0
    %575 = vmatpush1.msra.mxu0 0.0
    %576 = vmatprep.subr.mxu0 0.0
    %577 = vmatpush1.msra.mxu0 0.0
    %578 = vmatprep.subr.mxu0 0.0
    %579 = vmatpush1.msra.mxu0 %v544
    %580 = vmatprep.subr.mxu0 0.0
    %581 = vmatpush1.msra.mxu0 %v543
    %582 = vmatprep.subr.mxu0 0.0
    %583 = vmatpush1.msra.mxu0 %v542
    %584 = vmatprep.subr.mxu0 0.0
    %585 = vmatpush1.msra.mxu0 %v541
    %586 = vmatprep.subr.mxu0 0.0
    %587 = vmatpush2.msra.mxu0 0.0
    %588 = vmatprep.subr.mxu0 0.0
    %589 = vmatpush2.msra.mxu0 0.0
    %590 = vmatprep.subr.mxu0 0.0
    %591 = vmatpush2.msra.mxu0 0.0
    %592 = vmatprep.subr.mxu0 0.0
    %593 = vmatpush2.msra.mxu0 0.0
    %594 = vmatprep.subr.mxu0 0.0
    %595 = vmatpush2.msra.mxu0 0.0
    %596 = vmatprep.subr.mxu0 0.0
    %597 = vmatpush2.msra.mxu0 0.0
    %598 = vmatprep.subr.mxu0 0.0
    %599 = vmatpush2.msra.mxu0 0.0
    %600 = vmatprep.subr.mxu0 0.0
    %601 = vmatpush2.msra.mxu0 0.0
    %602 = vmatprep.subr.mxu0 0.0
    %603 = vmatpush2.msra.mxu0 0.0
    %604 = vmatprep.subr.mxu0 0.0
    %605 = vmatpush2.msra.mxu0 0.0
    %606 = vmatprep.subr.mxu0 0.0
    %607 = vmatpush2.msra.mxu0 0.0
    %608 = vmatprep.subr.mxu0 0.0
    %609 = vmatpush2.msra.mxu0 0.0
    %610 = vmatprep.subr.mxu0 0.0
    %611 = vmatpush2.msra.mxu0 0.0
    %612 = vmatprep.subr.mxu0 0.0
    %613 = vmatpush2.msra.mxu0 0.0
    %614 = vmatprep.subr.mxu0 0.0
    %615 = vmatpush2.msra.mxu0 0.0
    %616 = vmatprep.subr.mxu0 0.0
    %617 = vmatpush2.msra.mxu0 0.0
    %618 = vmatprep.mubr.f32.mxu0 0.0
    %619 = vmatmul.mubr.f32.gmra.mxu0 %v546
    %v620 = vpop.f32.mrf.mxu0
    %v621 = vadd.f32 0.0, %v620
    %v622 = vpop.f32.mrf.mxu0
    %623 = vmatprep.mubr.f32.mxu0 0.0
    %624 = vmatmul.mubr.f32.gmra.mxu0 %v549
    %v625 = vpop.f32.mrf.mxu0
    %v626 = vadd.f32 0.0, %v625
    %v627 = vpop.f32.mrf.mxu0
    %628 = vmatprep.mubr.f32.mxu0 0.0
    %629 = vmatmul.mubr.f32.gmra.mxu0 %v552
    %v630 = vpop.f32.mrf.mxu0
    %v631 = vadd.f32 0.0, %v630
    %v632 = vpop.f32.mrf.mxu0
    %633 = vdwg.mxu0
    %v635 = vsel %vm402, %v526, 0
    %v638 = vsel %vm402, %v528, 0
    %v641 = vsel %vm402, %v530, 0
    %643 = vmatprep.subr.mxu0 0.0
    %644 = vmatpush1.msra.mxu0 0.0
    %645 = vmatprep.subr.mxu0 0.0
    %646 = vmatpush1.msra.mxu0 0.0
    %647 = vmatprep.subr.mxu0 0.0
    %648 = vmatpush1.msra.mxu0 0.0
    %649 = vmatprep.subr.mxu0 0.0
    %650 = vmatpush1.msra.mxu0 0.0
    %651 = vmatprep.subr.mxu0 0.0
    %652 = vmatpush1.msra.mxu0 0.0
    %653 = vmatprep.subr.mxu0 0.0
    %654 = vmatpush1.msra.mxu0 0.0
    %655 = vmatprep.subr.mxu0 0.0
    %656 = vmatpush1.msra.mxu0 0.0
    %657 = vmatprep.subr.mxu0 0.0
    %658 = vmatpush1.msra.mxu0 0.0
    %659 = vmatprep.subr.mxu0 0.0
    %660 = vmatpush1.msra.mxu0 0.0
    %661 = vmatprep.subr.mxu0 0.0
    %662 = vmatpush1.msra.mxu0 0.0
    %663 = vmatprep.subr.mxu0 0.0
    %664 = vmatpush1.msra.mxu0 0.0
    %665 = vmatprep.subr.mxu0 0.0
    %666 = vmatpush1.msra.mxu0 0.0
    %667 = vmatprep.subr.mxu0 0.0
    %668 = vmatpush1.msra.mxu0 %v534
    %669 = vmatprep.subr.mxu0 0.0
    %670 = vmatpush1.msra.mxu0 %v533
    %671 = vmatprep.subr.mxu0 0.0
    %672 = vmatpush1.msra.mxu0 %v532
    %673 = vmatprep.subr.mxu0 0.0
    %674 = vmatpush1.msra.mxu0 %v531
    %675 = vmatprep.subr.mxu0 0.0
    %676 = vmatpush2.msra.mxu0 0.0
    %677 = vmatprep.subr.mxu0 0.0
    %678 = vmatpush2.msra.mxu0 0.0
    %679 = vmatprep.subr.mxu0 0.0
    %680 = vmatpush2.msra.mxu0 0.0
    %681 = vmatprep.subr.mxu0 0.0
    %682 = vmatpush2.msra.mxu0 0.0
    %683 = vmatprep.subr.mxu0 0.0
    %684 = vmatpush2.msra.mxu0 0.0
    %685 = vmatprep.subr.mxu0 0.0
    %686 = vmatpush2.msra.mxu0 0.0
    %687 = vmatprep.subr.mxu0 0.0
    %688 = vmatpush2.msra.mxu0 0.0
    %689 = vmatprep.subr.mxu0 0.0
    %690 = vmatpush2.msra.mxu0 0.0
    %691 = vmatprep.subr.mxu0 0.0
    %692 = vmatpush2.msra.mxu0 0.0
    %693 = vmatprep.subr.mxu0 0.0
    %694 = vmatpush2.msra.mxu0 0.0
    %695 = vmatprep.subr.mxu0 0.0
    %696 = vmatpush2.msra.mxu0 0.0
    %697 = vmatprep.subr.mxu0 0.0
    %698 = vmatpush2.msra.mxu0 0.0
    %699 = vmatprep.subr.mxu0 0.0
    %700 = vmatpush2.msra.mxu0 0.0
    %701 = vmatprep.subr.mxu0 0.0
    %702 = vmatpush2.msra.mxu0 0.0
    %703 = vmatprep.subr.mxu0 0.0
    %704 = vmatpush2.msra.mxu0 0.0
    %705 = vmatprep.subr.mxu0 0.0
    %706 = vmatpush2.msra.mxu0 0.0
    %707 = vmatprep.mubr.f32.mxu0 0.0
    %708 = vmatmul.mubr.f32.gmra.mxu0 %v635
    %v709 = vpop.f32.mrf.mxu0
    %v710 = vadd.f32 %v621, %v709
    %v711 = vpop.f32.mrf.mxu0
    %712 = vmatprep.mubr.f32.mxu0 0.0
    %713 = vmatmul.mubr.f32.gmra.mxu0 %v638
    %v714 = vpop.f32.mrf.mxu0
    %v715 = vadd.f32 %v626, %v714
    %v716 = vpop.f32.mrf.mxu0
    %717 = vmatprep.mubr.f32.mxu0 0.0
    %718 = vmatmul.mubr.f32.gmra.mxu0 %v641
    %v719 = vpop.f32.mrf.mxu0
    %v720 = vadd.f32 %v631, %v719
    %v721 = vpop.f32.mrf.mxu0
    %722 = vdwg.mxu0
    %s723 = scalar_lea.vmem [#allocation2], 2
    %v724 = vld [vmem:[%s723] ss:$2 sm:$0xff]
    %s725 = scalar_lea.vmem [#allocation2], 18
    %v726 = vld [vmem:[%s725] ss:$2 sm:$0xff]
    %s727 = scalar_lea.vmem [#allocation2], 34
    %v728 = vld [vmem:[%s727] ss:$2 sm:$0x1]
    %v729 = vld [vmem:[%s4 + $0x40] sm:$0xff]
    %v730 = vld [vmem:[%s4 + $0x48] sm:$0xff]
    %v731 = vld [vmem:[%s4 + $0x50] sm:$0xff]
    %v732 = vld [vmem:[%s4 + $0x58] sm:$0xff]
    %v734 = vsel %vm402, %v724, 0
    %v737 = vsel %vm402, %v726, 0
    %v740 = vsel %vm402, %v728, 0
    %742 = vmatprep.subr.mxu0 0.0
    %743 = vmatpush1.msra.mxu0 0.0
    %744 = vmatprep.subr.mxu0 0.0
    %745 = vmatpush1.msra.mxu0 0.0
    %746 = vmatprep.subr.mxu0 0.0
    %747 = vmatpush1.msra.mxu0 0.0
    %748 = vmatprep.subr.mxu0 0.0
    %749 = vmatpush1.msra.mxu0 0.0
    %750 = vmatprep.subr.mxu0 0.0
    %751 = vmatpush1.msra.mxu0 0.0
    %752 = vmatprep.subr.mxu0 0.0
    %753 = vmatpush1.msra.mxu0 0.0
    %754 = vmatprep.subr.mxu0 0.0
    %755 = vmatpush1.msra.mxu0 0.0
    %756 = vmatprep.subr.mxu0 0.0
    %757 = vmatpush1.msra.mxu0 0.0
    %758 = vmatprep.subr.mxu0 0.0
    %759 = vmatpush1.msra.mxu0 0.0
    %760 = vmatprep.subr.mxu0 0.0
    %761 = vmatpush1.msra.mxu0 0.0
    %762 = vmatprep.subr.mxu0 0.0
    %763 = vmatpush1.msra.mxu0 0.0
    %764 = vmatprep.subr.mxu0 0.0
    %765 = vmatpush1.msra.mxu0 0.0
    %766 = vmatprep.subr.mxu0 0.0
    %767 = vmatpush1.msra.mxu0 %v732
    %768 = vmatprep.subr.mxu0 0.0
    %769 = vmatpush1.msra.mxu0 %v731
    %770 = vmatprep.subr.mxu0 0.0
    %771 = vmatpush1.msra.mxu0 %v730
    %772 = vmatprep.subr.mxu0 0.0
    %773 = vmatpush1.msra.mxu0 %v729
    %774 = vmatprep.subr.mxu0 0.0
    %775 = vmatpush2.msra.mxu0 0.0
    %776 = vmatprep.subr.mxu0 0.0
    %777 = vmatpush2.msra.mxu0 0.0
    %778 = vmatprep.subr.mxu0 0.0
    %779 = vmatpush2.msra.mxu0 0.0
    %780 = vmatprep.subr.mxu0 0.0
    %781 = vmatpush2.msra.mxu0 0.0
    %782 = vmatprep.subr.mxu0 0.0
    %783 = vmatpush2.msra.mxu0 0.0
    %784 = vmatprep.subr.mxu0 0.0
    %785 = vmatpush2.msra.mxu0 0.0
    %786 = vmatprep.subr.mxu0 0.0
    %787 = vmatpush2.msra.mxu0 0.0
    %788 = vmatprep.subr.mxu0 0.0
    %789 = vmatpush2.msra.mxu0 0.0
    %790 = vmatprep.subr.mxu0 0.0
    %791 = vmatpush2.msra.mxu0 0.0
    %792 = vmatprep.subr.mxu0 0.0
    %793 = vmatpush2.msra.mxu0 0.0
    %794 = vmatprep.subr.mxu0 0.0
    %795 = vmatpush2.msra.mxu0 0.0
    %796 = vmatprep.subr.mxu0 0.0
    %797 = vmatpush2.msra.mxu0 0.0
    %798 = vmatprep.subr.mxu0 0.0
    %799 = vmatpush2.msra.mxu0 0.0
    %800 = vmatprep.subr.mxu0 0.0
    %801 = vmatpush2.msra.mxu0 0.0
    %802 = vmatprep.subr.mxu0 0.0
    %803 = vmatpush2.msra.mxu0 0.0
    %804 = vmatprep.subr.mxu0 0.0
    %805 = vmatpush2.msra.mxu0 0.0
    %806 = vmatprep.mubr.f32.mxu0 0.0
    %807 = vmatmul.mubr.f32.gmra.mxu0 %v734
    %v808 = vpop.f32.mrf.mxu0
    %v809 = vadd.f32 0.0, %v808
    %v810 = vpop.f32.mrf.mxu0
    %811 = vmatprep.mubr.f32.mxu0 0.0
    %812 = vmatmul.mubr.f32.gmra.mxu0 %v737
    %v813 = vpop.f32.mrf.mxu0
    %v814 = vadd.f32 0.0, %v813
    %v815 = vpop.f32.mrf.mxu0
    %816 = vmatprep.mubr.f32.mxu0 0.0
    %817 = vmatmul.mubr.f32.gmra.mxu0 %v740
    %v818 = vpop.f32.mrf.mxu0
    %v819 = vadd.f32 0.0, %v818
    %v820 = vpop.f32.mrf.mxu0
    %821 = vdwg.mxu0
    %v822 = vadd.f32 %v710, %v809
    %v823 = vadd.f32 %v715, %v814
    %v824 = vadd.f32 %v720, %v819
    %s825 = scalar_lea.vmem [#allocation2], 3
    %v826 = vld [vmem:[%s825] ss:$2 sm:$0xff]
    %s827 = scalar_lea.vmem [#allocation2], 19
    %v828 = vld [vmem:[%s827] ss:$2 sm:$0xff]
    %s829 = scalar_lea.vmem [#allocation2], 35
    %v830 = vld [vmem:[%s829] ss:$2 sm:$0x1]
    %v831 = vld [vmem:[%s4 + $0x60] sm:$0xff]
    %v832 = vld [vmem:[%s4 + $0x68] sm:$0xff]
    %v833 = vld [vmem:[%s4 + $0x70] sm:$0xff]
    %v834 = vld [vmem:[%s4 + $0x78] sm:$0xff]
    %v836 = vsel %vm402, %v826, 0
    %v839 = vsel %vm402, %v828, 0
    %v842 = vsel %vm402, %v830, 0
    %844 = vmatprep.subr.mxu0 0.0
    %845 = vmatpush1.msra.mxu0 0.0
    %846 = vmatprep.subr.mxu0 0.0
    %847 = vmatpush1.msra.mxu0 0.0
    %848 = vmatprep.subr.mxu0 0.0
    %849 = vmatpush1.msra.mxu0 0.0
    %850 = vmatprep.subr.mxu0 0.0
    %851 = vmatpush1.msra.mxu0 0.0
    %852 = vmatprep.subr.mxu0 0.0
    %853 = vmatpush1.msra.mxu0 0.0
    %854 = vmatprep.subr.mxu0 0.0
    %855 = vmatpush1.msra.mxu0 0.0
    %856 = vmatprep.subr.mxu0 0.0
    %857 = vmatpush1.msra.mxu0 0.0
    %858 = vmatprep.subr.mxu0 0.0
    %859 = vmatpush1.msra.mxu0 0.0
    %860 = vmatprep.subr.mxu0 0.0
    %861 = vmatpush1.msra.mxu0 0.0
    %862 = vmatprep.subr.mxu0 0.0
    %863 = vmatpush1.msra.mxu0 0.0
    %864 = vmatprep.subr.mxu0 0.0
    %865 = vmatpush1.msra.mxu0 0.0
    %866 = vmatprep.subr.mxu0 0.0
    %867 = vmatpush1.msra.mxu0 0.0
    %868 = vmatprep.subr.mxu0 0.0
    %869 = vmatpush1.msra.mxu0 %v834
    %870 = vmatprep.subr.mxu0 0.0
    %871 = vmatpush1.msra.mxu0 %v833
    %872 = vmatprep.subr.mxu0 0.0
    %873 = vmatpush1.msra.mxu0 %v832
    %874 = vmatprep.subr.mxu0 0.0
    %875 = vmatpush1.msra.mxu0 %v831
    %876 = vmatprep.subr.mxu0 0.0
    %877 = vmatpush2.msra.mxu0 0.0
    %878 = vmatprep.subr.mxu0 0.0
    %879 = vmatpush2.msra.mxu0 0.0
    %880 = vmatprep.subr.mxu0 0.0
    %881 = vmatpush2.msra.mxu0 0.0
    %882 = vmatprep.subr.mxu0 0.0
    %883 = vmatpush2.msra.mxu0 0.0
    %884 = vmatprep.subr.mxu0 0.0
    %885 = vmatpush2.msra.mxu0 0.0
    %886 = vmatprep.subr.mxu0 0.0
    %887 = vmatpush2.msra.mxu0 0.0
    %888 = vmatprep.subr.mxu0 0.0
    %889 = vmatpush2.msra.mxu0 0.0
    %890 = vmatprep.subr.mxu0 0.0
    %891 = vmatpush2.msra.mxu0 0.0
    %892 = vmatprep.subr.mxu0 0.0
    %893 = vmatpush2.msra.mxu0 0.0
    %894 = vmatprep.subr.mxu0 0.0
    %895 = vmatpush2.msra.mxu0 0.0
    %896 = vmatprep.subr.mxu0 0.0
    %897 = vmatpush2.msra.mxu0 0.0
    %898 = vmatprep.subr.mxu0 0.0
    %899 = vmatpush2.msra.mxu0 0.0
    %900 = vmatprep.subr.mxu0 0.0
    %901 = vmatpush2.msra.mxu0 0.0
    %902 = vmatprep.subr.mxu0 0.0
    %903 = vmatpush2.msra.mxu0 0.0
    %904 = vmatprep.subr.mxu0 0.0
    %905 = vmatpush2.msra.mxu0 0.0
    %906 = vmatprep.subr.mxu0 0.0
    %907 = vmatpush2.msra.mxu0 0.0
    %908 = vmatprep.mubr.f32.mxu0 0.0
    %909 = vmatmul.mubr.f32.gmra.mxu0 %v836
    %v910 = vpop.f32.mrf.mxu0
    %v911 = vadd.f32 0.0, %v910
    %v912 = vpop.f32.mrf.mxu0
    %913 = vmatprep.mubr.f32.mxu0 0.0
    %914 = vmatmul.mubr.f32.gmra.mxu0 %v839
    %v915 = vpop.f32.mrf.mxu0
    %v916 = vadd.f32 0.0, %v915
    %v917 = vpop.f32.mrf.mxu0
    %918 = vmatprep.mubr.f32.mxu0 0.0
    %919 = vmatmul.mubr.f32.gmra.mxu0 %v842
    %v920 = vpop.f32.mrf.mxu0
    %v921 = vadd.f32 0.0, %v920
    %v922 = vpop.f32.mrf.mxu0
    %923 = vdwg.mxu0
    %v924 = vadd.f32 %v822, %v911
    %v925 = vadd.f32 %v823, %v916
    %v926 = vadd.f32 %v824, %v921
    %v927 = vld [vmem:[%s5] sm:$0x1]
    %v928 = vld [vmem:[%s6] sm:$0x1]
    %v929 = vsel %vm402, %v924, 0.0
    %v930 = vrot.slane %v929, 4
    %v931 = vadd.f32 %v929, %v930
    %v932 = vrot.slane %v931, 2
    %v933 = vadd.f32 %v931, %v932
    %v934 = vrot.slane %v933, 1
    %v935 = vadd.f32 %v933, %v934
    %v936 = vadd.f32 %v935, 0.0
    %vm939 = vcmask 1046528
    %v940 = vrot.slane %v925, 1
    %v941 = vrot.slane %v926, 1
    %v942 = vsel %vm939, %v940, %v941
    %v944 = vsel %vm402, %v942, 0.0
    %v945 = vrot.slane %v944, 4
    %v946 = vadd.f32 %v944, %v945
    %v947 = vrot.slane %v946, 2
    %v948 = vadd.f32 %v946, %v947
    %v949 = vrot.slane %v948, 1
    %v950 = vadd.f32 %v948, %v949
    %v951 = vadd.f32 %v936, %v950
    %v952 = vrcp.pop 16.0
    %v953 = vmul.f32 %v951, %v952
    %v954 = vsub.f32 %v924, %v953
    %v955 = vmul.f32 %v954, %v954
    %v956 = vsel %vm402, %v955, 0.0
    %v957 = vrot.slane %v956, 4
    %v958 = vadd.f32 %v956, %v957
    %v959 = vrot.slane %v958, 2
    %v960 = vadd.f32 %v958, %v959
    %v961 = vrot.slane %v960, 1
    %v962 = vadd.f32 %v960, %v961
    %v963 = vadd.f32 %v962, 0.0
    %v964 = vsub.f32 %v925, %v953
    %v965 = vsub.f32 %v926, %v953
    %v966 = vmul.f32 %v964, %v964
    %v967 = vmul.f32 %v965, %v965
    %v970 = vrot.slane %v966, 1
    %v971 = vrot.slane %v967, 1
    %v972 = vsel %vm939, %v970, %v971
    %v974 = vsel %vm402, %v972, 0.0
    %v975 = vrot.slane %v974, 4
    %v976 = vadd.f32 %v974, %v975
    %v977 = vrot.slane %v976, 2
    %v978 = vadd.f32 %v976, %v977
    %v979 = vrot.slane %v978, 1
    %v980 = vadd.f32 %v978, %v979
    %v981 = vadd.f32 %v963, %v980
    %v982 = vmul.f32 %v981, %v952
    %v983 = vadd.f32 %v982, 1e-05
    %v984 = vrsqrt.pop %v983
    %v985 = vmul.f32 %v927, %v984
    %v986 = vmul.f32 %v953, %v985
    %v987 = vsub.f32 %v928, %v986
    %v989 = vlaneseq
    %v990 = vshrl.u32 %v989, 7
    %v991 = vsub.s32 0, %v990
    %v992 = vrot.slane %v985, %v991
    %v994 = vmul.f32 %v924, %v992
    %v996 = vlaneseq
    %v997 = vshrl.u32 %v996, 7
    %v998 = vsub.s32 0, %v997
    %v999 = vrot.slane %v987, %v998
    %v1001 = vadd.f32 %v994, %v999
    %1003 = vrot.lane.b32.xlu0 %v924, 96
    %v1004 = vpop.permute.xlu0 %1003
    %v1006 = vadd.f32 %v1001, %v1004
    %vm1007 = vcmp.ge.f32.partialorder %v1006, 0.0
    %v1008 = vmul.f32 %v1006, 0.2
    %v1009 = vsel %vm1007, %v1006, %v1008
    %v1010 = vmul.f32 %v925, %v992
    %v1011 = vmul.f32 %v926, %v992
    %v1012 = vadd.f32 %v1010, %v999
    %v1013 = vadd.f32 %v1011, %v999
    %1014 = vrot.lane.b32.xlu0 %v925, 96
    %v1015 = vpop.permute.xlu0 %1014
    %1016 = vrot.lane.b32.xlu0 %v926, 96
    %v1017 = vpop.permute.xlu0 %1016
    %v1020 = vadd.f32 %v1012, %v1015
    %v1021 = vadd.f32 %v1013, %v1017
    %vm1022 = vcmp.ge.f32.partialorder %v1020, 0.0
    %vm1023 = vcmp.ge.f32.partialorder %v1021, 0.0
    %v1024 = vmul.f32 %v1020, 0.2
    %v1025 = vmul.f32 %v1021, 0.2
    %v1026 = vsel %vm1022, %v1020, %v1024
    %v1027 = vsel %vm1023, %v1021, %v1025
    %1028 = vst.msk [vmem:[#allocation3 + $0x1] sm:$0xff] %vm402, %v1009
    %vm1029 = vcmask 261121
    %1030 = vst.msk [vmem:[#allocation3 + $0xa] sm:$0xfe] %vm1029, %v1026
    %1031 = vst.msk [vmem:[#allocation3 + $0x12] sm:$0x1] %vm45, %v1027
    %v1032 = vld [vmem:[#allocation3] ss:$2 sm:$0xff]
    %s1033 = scalar_lea.vmem [#allocation3], 16
    %v1034 = vld [vmem:[%s1033] ss:$2 sm:$0x1]
    %v1035 = vld [vmem:[%s7] sm:$0xff]
    %v1036 = vld [vmem:[%s7 + $0x8] sm:$0xff]
    %v1037 = vld [vmem:[%s7 + $0x10] sm:$0xff]
    %v1038 = vld [vmem:[%s7 + $0x18] sm:$0xff]
    %s1039 = scalar_lea.vmem [#allocation3], 1
    %v1040 = vld [vmem:[%s1039] ss:$2 sm:$0xff]
    %s1041 = scalar_lea.vmem [#allocation3], 17
    %v1042 = vld [vmem:[%s1041] ss:$2 sm:$0x1]
    %v1043 = vld [vmem:[%s7 + $0x20] sm:$0xff]
    %v1044 = vld [vmem:[%s7 + $0x28] sm:$0xff]
    %v1045 = vld [vmem:[%s7 + $0x30] sm:$0xff]
    %v1046 = vld [vmem:[%s7 + $0x38] sm:$0xff]
    %v1048 = vsel %vm402, %v1040, 0
    %v1051 = vsel %vm402, %v1042, 0
    %1053 = vmatprep.subr.mxu0 0.0
    %1054 = vmatpush1.msra.mxu0 0.0
    %1055 = vmatprep.subr.mxu0 0.0
    %1056 = vmatpush1.msra.mxu0 0.0
    %1057 = vmatprep.subr.mxu0 0.0
    %1058 = vmatpush1.msra.mxu0 0.0
    %1059 = vmatprep.subr.mxu0 0.0
    %1060 = vmatpush1.msra.mxu0 0.0
    %1061 = vmatprep.subr.mxu0 0.0
    %1062 = vmatpush1.msra.mxu0 0.0
    %1063 = vmatprep.subr.mxu0 0.0
    %1064 = vmatpush1.msra.mxu0 0.0
    %1065 = vmatprep.subr.mxu0 0.0
    %1066 = vmatpush1.msra.mxu0 0.0
    %1067 = vmatprep.subr.mxu0 0.0
    %1068 = vmatpush1.msra.mxu0 0.0
    %1069 = vmatprep.subr.mxu0 0.0
    %1070 = vmatpush1.msra.mxu0 0.0
    %1071 = vmatprep.subr.mxu0 0.0
    %1072 = vmatpush1.msra.mxu0 0.0
    %1073 = vmatprep.subr.mxu0 0.0
    %1074 = vmatpush1.msra.mxu0 0.0
    %1075 = vmatprep.subr.mxu0 0.0
    %1076 = vmatpush1.msra.mxu0 0.0
    %1077 = vmatprep.subr.mxu0 0.0
    %1078 = vmatpush1.msra.mxu0 %v1046
    %1079 = vmatprep.subr.mxu0 0.0
    %1080 = vmatpush1.msra.mxu0 %v1045
    %1081 = vmatprep.subr.mxu0 0.0
    %1082 = vmatpush1.msra.mxu0 %v1044
    %1083 = vmatprep.subr.mxu0 0.0
    %1084 = vmatpush1.msra.mxu0 %v1043
    %1085 = vmatprep.subr.mxu0 0.0
    %1086 = vmatpush2.msra.mxu0 0.0
    %1087 = vmatprep.subr.mxu0 0.0
    %1088 = vmatpush2.msra.mxu0 0.0
    %1089 = vmatprep.subr.mxu0 0.0
    %1090 = vmatpush2.msra.mxu0 0.0
    %1091 = vmatprep.subr.mxu0 0.0
    %1092 = vmatpush2.msra.mxu0 0.0
    %1093 = vmatprep.subr.mxu0 0.0
    %1094 = vmatpush2.msra.mxu0 0.0
    %1095 = vmatprep.subr.mxu0 0.0
    %1096 = vmatpush2.msra.mxu0 0.0
    %1097 = vmatprep.subr.mxu0 0.0
    %1098 = vmatpush2.msra.mxu0 0.0
    %1099 = vmatprep.subr.mxu0 0.0
    %1100 = vmatpush2.msra.mxu0 0.0
    %1101 = vmatprep.subr.mxu0 0.0
    %1102 = vmatpush2.msra.mxu0 0.0
    %1103 = vmatprep.subr.mxu0 0.0
    %1104 = vmatpush2.msra.mxu0 0.0
    %1105 = vmatprep.subr.mxu0 0.0
    %1106 = vmatpush2.msra.mxu0 0.0
    %1107 = vmatprep.subr.mxu0 0.0
    %1108 = vmatpush2.msra.mxu0 0.0
    %1109 = vmatprep.subr.mxu0 0.0
    %1110 = vmatpush2.msra.mxu0 0.0
    %1111 = vmatprep.subr.mxu0 0.0
    %1112 = vmatpush2.msra.mxu0 0.0
    %1113 = vmatprep.subr.mxu0 0.0
    %1114 = vmatpush2.msra.mxu0 0.0
    %1115 = vmatprep.subr.mxu0 0.0
    %1116 = vmatpush2.msra.mxu0 0.0
    %1117 = vmatprep.mubr.f32.mxu0 0.0
    %1118 = vmatmul.mubr.f32.gmra.mxu0 %v1048
    %v1119 = vpop.f32.mrf.mxu0
    %v1120 = vadd.f32 0.0, %v1119
    %v1121 = vpop.f32.mrf.mxu0
    %1122 = vmatprep.mubr.f32.mxu0 0.0
    %1123 = vmatmul.mubr.f32.gmra.mxu0 %v1051
    %v1124 = vpop.f32.mrf.mxu0
    %v1125 = vadd.f32 0.0, %v1124
    %v1126 = vpop.f32.mrf.mxu0
    %1127 = vdwg.mxu0
    %v1129 = vsel %vm402, %v1032, 0
    %v1132 = vsel %vm402, %v1034, 0
    %1134 = vmatprep.subr.mxu0 0.0
    %1135 = vmatpush1.msra.mxu0 0.0
    %1136 = vmatprep.subr.mxu0 0.0
    %1137 = vmatpush1.msra.mxu0 0.0
    %1138 = vmatprep.subr.mxu0 0.0
    %1139 = vmatpush1.msra.mxu0 0.0
    %1140 = vmatprep.subr.mxu0 0.0
    %1141 = vmatpush1.msra.mxu0 0.0
    %1142 = vmatprep.subr.mxu0 0.0
    %1143 = vmatpush1.msra.mxu0 0.0
    %1144 = vmatprep.subr.mxu0 0.0
    %1145 = vmatpush1.msra.mxu0 0.0
    %1146 = vmatprep.subr.mxu0 0.0
    %1147 = vmatpush1.msra.mxu0 0.0
    %1148 = vmatprep.subr.mxu0 0.0
    %1149 = vmatpush1.msra.mxu0 0.0
    %1150 = vmatprep.subr.mxu0 0.0
    %1151 = vmatpush1.msra.mxu0 0.0
    %1152 = vmatprep.subr.mxu0 0.0
    %1153 = vmatpush1.msra.mxu0 0.0
    %1154 = vmatprep.subr.mxu0 0.0
    %1155 = vmatpush1.msra.mxu0 0.0
    %1156 = vmatprep.subr.mxu0 0.0
    %1157 = vmatpush1.msra.mxu0 0.0
    %1158 = vmatprep.subr.mxu0 0.0
    %1159 = vmatpush1.msra.mxu0 %v1038
    %1160 = vmatprep.subr.mxu0 0.0
    %1161 = vmatpush1.msra.mxu0 %v1037
    %1162 = vmatprep.subr.mxu0 0.0
    %1163 = vmatpush1.msra.mxu0 %v1036
    %1164 = vmatprep.subr.mxu0 0.0
    %1165 = vmatpush1.msra.mxu0 %v1035
    %1166 = vmatprep.subr.mxu0 0.0
    %1167 = vmatpush2.msra.mxu0 0.0
    %1168 = vmatprep.subr.mxu0 0.0
    %1169 = vmatpush2.msra.mxu0 0.0
    %1170 = vmatprep.subr.mxu0 0.0
    %1171 = vmatpush2.msra.mxu0 0.0
    %1172 = vmatprep.subr.mxu0 0.0
    %1173 = vmatpush2.msra.mxu0 0.0
    %1174 = vmatprep.subr.mxu0 0.0
    %1175 = vmatpush2.msra.mxu0 0.0
    %1176 = vmatprep.subr.mxu0 0.0
    %1177 = vmatpush2.msra.mxu0 0.0
    %1178 = vmatprep.subr.mxu0 0.0
    %1179 = vmatpush2.msra.mxu0 0.0
    %1180 = vmatprep.subr.mxu0 0.0
    %1181 = vmatpush2.msra.mxu0 0.0
    %1182 = vmatprep.subr.mxu0 0.0
    %1183 = vmatpush2.msra.mxu0 0.0
    %1184 = vmatprep.subr.mxu0 0.0
    %1185 = vmatpush2.msra.mxu0 0.0
    %1186 = vmatprep.subr.mxu0 0.0
    %1187 = vmatpush2.msra.mxu0 0.0
    %1188 = vmatprep.subr.mxu0 0.0
    %1189 = vmatpush2.msra.mxu0 0.0
    %1190 = vmatprep.subr.mxu0 0.0
    %1191 = vmatpush2.msra.mxu0 0.0
    %1192 = vmatprep.subr.mxu0 0.0
    %1193 = vmatpush2.msra.mxu0 0.0
    %1194 = vmatprep.subr.mxu0 0.0
    %1195 = vmatpush2.msra.mxu0 0.0
    %1196 = vmatprep.subr.mxu0 0.0
    %1197 = vmatpush2.msra.mxu0 0.0
    %1198 = vmatprep.mubr.f32.mxu0 0.0
    %1199 = vmatmul.mubr.f32.gmra.mxu0 %v1129
    %v1200 = vpop.f32.mrf.mxu0
    %v1201 = vadd.f32 %v1120, %v1200
    %v1202 = vpop.f32.mrf.mxu0
    %1203 = vmatprep.mubr.f32.mxu0 0.0
    %1204 = vmatmul.mubr.f32.gmra.mxu0 %v1132
    %v1205 = vpop.f32.mrf.mxu0
    %v1206 = vadd.f32 %v1125, %v1205
    %v1207 = vpop.f32.mrf.mxu0
    %1208 = vdwg.mxu0
    %s1209 = scalar_lea.vmem [#allocation3], 2
    %v1210 = vld [vmem:[%s1209] ss:$2 sm:$0xff]
    %s1211 = scalar_lea.vmem [#allocation3], 18
    %v1212 = vld [vmem:[%s1211] ss:$2 sm:$0x1]
    %v1213 = vld [vmem:[%s7 + $0x40] sm:$0xff]
    %v1214 = vld [vmem:[%s7 + $0x48] sm:$0xff]
    %v1215 = vld [vmem:[%s7 + $0x50] sm:$0xff]
    %v1216 = vld [vmem:[%s7 + $0x58] sm:$0xff]
    %v1218 = vsel %vm402, %v1210, 0
    %v1221 = vsel %vm402, %v1212, 0
    %1223 = vmatprep.subr.mxu0 0.0
    %1224 = vmatpush1.msra.mxu0 0.0
    %1225 = vmatprep.subr.mxu0 0.0
    %1226 = vmatpush1.msra.mxu0 0.0
    %1227 = vmatprep.subr.mxu0 0.0
    %1228 = vmatpush1.msra.mxu0 0.0
    %1229 = vmatprep.subr.mxu0 0.0
    %1230 = vmatpush1.msra.mxu0 0.0
    %1231 = vmatprep.subr.mxu0 0.0
    %1232 = vmatpush1.msra.mxu0 0.0
    %1233 = vmatprep.subr.mxu0 0.0
    %1234 = vmatpush1.msra.mxu0 0.0
    %1235 = vmatprep.subr.mxu0 0.0
    %1236 = vmatpush1.msra.mxu0 0.0
    %1237 = vmatprep.subr.mxu0 0.0
    %1238 = vmatpush1.msra.mxu0 0.0
    %1239 = vmatprep.subr.mxu0 0.0
    %1240 = vmatpush1.msra.mxu0 0.0
    %1241 = vmatprep.subr.mxu0 0.0
    %1242 = vmatpush1.msra.mxu0 0.0
    %1243 = vmatprep.subr.mxu0 0.0
    %1244 = vmatpush1.msra.mxu0 0.0
    %1245 = vmatprep.subr.mxu0 0.0
    %1246 = vmatpush1.msra.mxu0 0.0
    %1247 = vmatprep.subr.mxu0 0.0
    %1248 = vmatpush1.msra.mxu0 %v1216
    %1249 = vmatprep.subr.mxu0 0.0
    %1250 = vmatpush1.msra.mxu0 %v1215
    %1251 = vmatprep.subr.mxu0 0.0
    %1252 = vmatpush1.msra.mxu0 %v1214
    %1253 = vmatprep.subr.mxu0 0.0
    %1254 = vmatpush1.msra.mxu0 %v1213
    %1255 = vmatprep.subr.mxu0 0.0
    %1256 = vmatpush2.msra.mxu0 0.0
    %1257 = vmatprep.subr.mxu0 0.0
    %1258 = vmatpush2.msra.mxu0 0.0
    %1259 = vmatprep.subr.mxu0 0.0
    %1260 = vmatpush2.msra.mxu0 0.0
    %1261 = vmatprep.subr.mxu0 0.0
    %1262 = vmatpush2.msra.mxu0 0.0
    %1263 = vmatprep.subr.mxu0 0.0
    %1264 = vmatpush2.msra.mxu0 0.0
    %1265 = vmatprep.subr.mxu0 0.0
    %1266 = vmatpush2.msra.mxu0 0.0
    %1267 = vmatprep.subr.mxu0 0.0
    %1268 = vmatpush2.msra.mxu0 0.0
    %1269 = vmatprep.subr.mxu0 0.0
    %1270 = vmatpush2.msra.mxu0 0.0
    %1271 = vmatprep.subr.mxu0 0.0
    %1272 = vmatpush2.msra.mxu0 0.0
    %1273 = vmatprep.subr.mxu0 0.0
    %1274 = vmatpush2.msra.mxu0 0.0
    %1275 = vmatprep.subr.mxu0 0.0
    %1276 = vmatpush2.msra.mxu0 0.0
    %1277 = vmatprep.subr.mxu0 0.0
    %1278 = vmatpush2.msra.mxu0 0.0
    %1279 = vmatprep.subr.mxu0 0.0
    %1280 = vmatpush2.msra.mxu0 0.0
    %1281 = vmatprep.subr.mxu0 0.0
    %1282 = vmatpush2.msra.mxu0 0.0
    %1283 = vmatprep.subr.mxu0 0.0
    %1284 = vmatpush2.msra.mxu0 0.0
    %1285 = vmatprep.subr.mxu0 0.0
    %1286 = vmatpush2.msra.mxu0 0.0
    %1287 = vmatprep.mubr.f32.mxu0 0.0
    %1288 = vmatmul.mubr.f32.gmra.mxu0 %v1218
    %v1289 = vpop.f32.mrf.mxu0
    %v1290 = vadd.f32 0.0, %v1289
    %v1291 = vpop.f32.mrf.mxu0
    %1292 = vmatprep.mubr.f32.mxu0 0.0
    %1293 = vmatmul.mubr.f32.gmra.mxu0 %v1221
    %v1294 = vpop.f32.mrf.mxu0
    %v1295 = vadd.f32 0.0, %v1294
    %v1296 = vpop.f32.mrf.mxu0
    %1297 = vdwg.mxu0
    %v1298 = vadd.f32 %v1201, %v1290
    %v1299 = vadd.f32 %v1206, %v1295
    %s1300 = scalar_lea.vmem [#allocation3], 3
    %v1301 = vld [vmem:[%s1300] ss:$2 sm:$0xff]
    %s1302 = scalar_lea.vmem [#allocation3], 19
    %v1303 = vld [vmem:[%s1302] ss:$2 sm:$0x1]
    %v1304 = vld [vmem:[%s7 + $0x60] sm:$0xff]
    %v1305 = vld [vmem:[%s7 + $0x68] sm:$0xff]
    %v1306 = vld [vmem:[%s7 + $0x70] sm:$0xff]
    %v1307 = vld [vmem:[%s7 + $0x78] sm:$0xff]
    %v1309 = vsel %vm402, %v1301, 0
    %v1312 = vsel %vm402, %v1303, 0
    %1314 = vmatprep.subr.mxu0 0.0
    %1315 = vmatpush1.msra.mxu0 0.0
    %1316 = vmatprep.subr.mxu0 0.0
    %1317 = vmatpush1.msra.mxu0 0.0
    %1318 = vmatprep.subr.mxu0 0.0
    %1319 = vmatpush1.msra.mxu0 0.0
    %1320 = vmatprep.subr.mxu0 0.0
    %1321 = vmatpush1.msra.mxu0 0.0
    %1322 = vmatprep.subr.mxu0 0.0
    %1323 = vmatpush1.msra.mxu0 0.0
    %1324 = vmatprep.subr.mxu0 0.0
    %1325 = vmatpush1.msra.mxu0 0.0
    %1326 = vmatprep.subr.mxu0 0.0
    %1327 = vmatpush1.msra.mxu0 0.0
    %1328 = vmatprep.subr.mxu0 0.0
    %1329 = vmatpush1.msra.mxu0 0.0
    %1330 = vmatprep.subr.mxu0 0.0
    %1331 = vmatpush1.msra.mxu0 0.0
    %1332 = vmatprep.subr.mxu0 0.0
    %1333 = vmatpush1.msra.mxu0 0.0
    %1334 = vmatprep.subr.mxu0 0.0
    %1335 = vmatpush1.msra.mxu0 0.0
    %1336 = vmatprep.subr.mxu0 0.0
    %1337 = vmatpush1.msra.mxu0 0.0
    %1338 = vmatprep.subr.mxu0 0.0
    %1339 = vmatpush1.msra.mxu0 %v1307
    %1340 = vmatprep.subr.mxu0 0.0
    %1341 = vmatpush1.msra.mxu0 %v1306
    %1342 = vmatprep.subr.mxu0 0.0
    %1343 = vmatpush1.msra.mxu0 %v1305
    %1344 = vmatprep.subr.mxu0 0.0
    %1345 = vmatpush1.msra.mxu0 %v1304
    %1346 = vmatprep.subr.mxu0 0.0
    %1347 = vmatpush2.msra.mxu0 0.0
    %1348 = vmatprep.subr.mxu0 0.0
    %1349 = vmatpush2.msra.mxu0 0.0
    %1350 = vmatprep.subr.mxu0 0.0
    %1351 = vmatpush2.msra.mxu0 0.0
    %1352 = vmatprep.subr.mxu0 0.0
    %1353 = vmatpush2.msra.mxu0 0.0
    %1354 = vmatprep.subr.mxu0 0.0
    %1355 = vmatpush2.msra.mxu0 0.0
    %1356 = vmatprep.subr.mxu0 0.0
    %1357 = vmatpush2.msra.mxu0 0.0
    %1358 = vmatprep.subr.mxu0 0.0
    %1359 = vmatpush2.msra.mxu0 0.0
    %1360 = vmatprep.subr.mxu0 0.0
    %1361 = vmatpush2.msra.mxu0 0.0
    %1362 = vmatprep.subr.mxu0 0.0
    %1363 = vmatpush2.msra.mxu0 0.0
    %1364 = vmatprep.subr.mxu0 0.0
    %1365 = vmatpush2.msra.mxu0 0.0
    %1366 = vmatprep.subr.mxu0 0.0
    %1367 = vmatpush2.msra.mxu0 0.0
    %1368 = vmatprep.subr.mxu0 0.0
    %1369 = vmatpush2.msra.mxu0 0.0
    %1370 = vmatprep.subr.mxu0 0.0
    %1371 = vmatpush2.msra.mxu0 0.0
    %1372 = vmatprep.subr.mxu0 0.0
    %1373 = vmatpush2.msra.mxu0 0.0
    %1374 = vmatprep.subr.mxu0 0.0
    %1375 = vmatpush2.msra.mxu0 0.0
    %1376 = vmatprep.subr.mxu0 0.0
    %1377 = vmatpush2.msra.mxu0 0.0
    %1378 = vmatprep.mubr.f32.mxu0 0.0
    %1379 = vmatmul.mubr.f32.gmra.mxu0 %v1309
    %v1380 = vpop.f32.mrf.mxu0
    %v1381 = vadd.f32 0.0, %v1380
    %v1382 = vpop.f32.mrf.mxu0
    %1383 = vmatprep.mubr.f32.mxu0 0.0
    %1384 = vmatmul.mubr.f32.gmra.mxu0 %v1312
    %v1385 = vpop.f32.mrf.mxu0
    %v1386 = vadd.f32 0.0, %v1385
    %v1387 = vpop.f32.mrf.mxu0
    %1388 = vdwg.mxu0
    %v1389 = vadd.f32 %v1298, %v1381
    %v1390 = vadd.f32 %v1299, %v1386
    %v1391 = vld [vmem:[%s8] sm:$0x1]
    %v1392 = vld [vmem:[%s9] sm:$0x1]
    %vm1393 = vcmask 257024
    %v1394 = vsel %vm1393, %v1389, 0.0
    %v1395 = vrot.slane %v1394, 4
    %v1396 = vadd.f32 %v1394, %v1395
    %v1397 = vrot.slane %v1396, 2
    %v1398 = vadd.f32 %v1396, %v1397
    %v1399 = vrot.slane %v1398, 1
    %v1400 = vadd.f32 %v1398, %v1399
    %v1401 = vadd.f32 %v1400, 0.0
    %vm1404 = vcmask 1042432
    %v1405 = vrot.slane %v1389, 5
    %v1406 = vrot.slane %v1390, 5
    %v1407 = vsel %vm1404, %v1405, %v1406
    %v1409 = vsel %vm1393, %v1407, 0.0
    %v1410 = vrot.slane %v1409, 4
    %v1411 = vadd.f32 %v1409, %v1410
    %v1412 = vrot.slane %v1411, 2
    %v1413 = vadd.f32 %v1411, %v1412
    %v1414 = vrot.slane %v1413, 1
    %v1415 = vadd.f32 %v1413, %v1414
    %v1416 = vadd.f32 %v1401, %v1415
    %v1417 = vrcp.pop 8.0
    %v1418 = vmul.f32 %v1416, %v1417
    %v1419 = vsub.f32 %v1389, %v1418
    %v1420 = vmul.f32 %v1419, %v1419
    %v1421 = vsel %vm1393, %v1420, 0.0
    %v1422 = vrot.slane %v1421, 4
    %v1423 = vadd.f32 %v1421, %v1422
    %v1424 = vrot.slane %v1423, 2
    %v1425 = vadd.f32 %v1423, %v1424
    %v1426 = vrot.slane %v1425, 1
    %v1427 = vadd.f32 %v1425, %v1426
    %v1428 = vadd.f32 %v1427, 0.0
    %v1429 = vsub.f32 %v1390, %v1418
    %v1430 = vmul.f32 %v1429, %v1429
    %v1433 = vrot.slane %v1420, 5
    %v1434 = vrot.slane %v1430, 5
    %v1435 = vsel %vm1404, %v1433, %v1434
    %v1437 = vsel %vm1393, %v1435, 0.0
    %v1438 = vrot.slane %v1437, 4
    %v1439 = vadd.f32 %v1437, %v1438
    %v1440 = vrot.slane %v1439, 2
    %v1441 = vadd.f32 %v1439, %v1440
    %v1442 = vrot.slane %v1441, 1
    %v1443 = vadd.f32 %v1441, %v1442
    %v1444 = vadd.f32 %v1428, %v1443
    %v1445 = vmul.f32 %v1444, %v1417
    %v1446 = vadd.f32 %v1445, 1e-05
    %v1447 = vrsqrt.pop %v1446
    %v1448 = vmul.f32 %v1391, %v1447
    %v1449 = vmul.f32 %v1418, %v1448
    %v1450 = vsub.f32 %v1392, %v1449
    %v1452 = vlaneseq
    %v1453 = vshrl.u32 %v1452, 7
    %v1454 = vsub.s32 0, %v1453
    %v1455 = vrot.slane %v1448, %v1454
    %v1457 = vmul.f32 %v1389, %v1455
    %v1459 = vlaneseq
    %v1460 = vshrl.u32 %v1459, 7
    %v1461 = vsub.s32 0, %v1460
    %v1462 = vrot.slane %v1450, %v1461
    %v1464 = vadd.f32 %v1457, %v1462
    %1465 = vrot.lane.b32.xlu0 %v1389, 96
    %v1466 = vpop.permute.xlu0 %1465
    %v1468 = vadd.f32 %v1464, %v1466
    %vm1469 = vcmp.ge.f32.partialorder %v1468, 0.0
    %v1470 = vmul.f32 %v1468, 0.2
    %v1471 = vsel %vm1469, %v1468, %v1470
    %v1472 = vmul.f32 %v1390, %v1455
    %v1473 = vadd.f32 %v1472, %v1462
    %1474 = vrot.lane.b32.xlu0 %v1390, 96
    %v1475 = vpop.permute.xlu0 %1474
    %v1477 = vadd.f32 %v1473, %v1475
    %vm1478 = vcmp.ge.f32.partialorder %v1477, 0.0
    %v1479 = vmul.f32 %v1477, 0.2
    %v1480 = vsel %vm1478, %v1477, %v1479
    %1481 = vst.msk [vmem:[#allocation4 + $0x1] sm:$0xf] %vm1393, %v1471
    %vm1482 = vcmask 261125
    %1483 = vst.msk [vmem:[#allocation4 + $0x2] sm:$0xe0] %vm1482, %v1471
    %1484 = vst.msk [vmem:[#allocation4 + $0xa] sm:$0x1] %vm45, %v1480
    %v1485 = vld [vmem:[#allocation4] ss:$2 sm:$0x1f]
    %v1486 = vld [vmem:[%s10] sm:$0xff]
    %v1487 = vld [vmem:[%s10 + $0x8] sm:$0xff]
    %v1488 = vld [vmem:[%s10 + $0x10] sm:$0xff]
    %v1489 = vld [vmem:[%s10 + $0x18] sm:$0xff]
    %s1490 = scalar_lea.vmem [#allocation4], 1
    %v1491 = vld [vmem:[%s1490] ss:$2 sm:$0x1f]
    %v1492 = vld [vmem:[%s10 + $0x20] sm:$0xff]
    %v1493 = vld [vmem:[%s10 + $0x28] sm:$0xff]
    %v1494 = vld [vmem:[%s10 + $0x30] sm:$0xff]
    %v1495 = vld [vmem:[%s10 + $0x38] sm:$0xff]
    %v1497 = vsel %vm402, %v1491, 0
    %1499 = vmatprep.subr.mxu0 0.0
    %1500 = vmatpush1.msra.mxu0 0.0
    %1501 = vmatprep.subr.mxu0 0.0
    %1502 = vmatpush1.msra.mxu0 0.0
    %1503 = vmatprep.subr.mxu0 0.0
    %1504 = vmatpush1.msra.mxu0 0.0
    %1505 = vmatprep.subr.mxu0 0.0
    %1506 = vmatpush1.msra.mxu0 0.0
    %1507 = vmatprep.subr.mxu0 0.0
    %1508 = vmatpush1.msra.mxu0 0.0
    %1509 = vmatprep.subr.mxu0 0.0
    %1510 = vmatpush1.msra.mxu0 0.0
    %1511 = vmatprep.subr.mxu0 0.0
    %1512 = vmatpush1.msra.mxu0 0.0
    %1513 = vmatprep.subr.mxu0 0.0
    %1514 = vmatpush1.msra.mxu0 0.0
    %1515 = vmatprep.subr.mxu0 0.0
    %1516 = vmatpush1.msra.mxu0 0.0
    %1517 = vmatprep.subr.mxu0 0.0
    %1518 = vmatpush1.msra.mxu0 0.0
    %1519 = vmatprep.subr.mxu0 0.0
    %1520 = vmatpush1.msra.mxu0 0.0
    %1521 = vmatprep.subr.mxu0 0.0
    %1522 = vmatpush1.msra.mxu0 0.0
    %1523 = vmatprep.subr.mxu0 0.0
    %1524 = vmatpush1.msra.mxu0 %v1495
    %1525 = vmatprep.subr.mxu0 0.0
    %1526 = vmatpush1.msra.mxu0 %v1494
    %1527 = vmatprep.subr.mxu0 0.0
    %1528 = vmatpush1.msra.mxu0 %v1493
    %1529 = vmatprep.subr.mxu0 0.0
    %1530 = vmatpush1.msra.mxu0 %v1492
    %1531 = vmatprep.subr.mxu0 0.0
    %1532 = vmatpush2.msra.mxu0 0.0
    %1533 = vmatprep.subr.mxu0 0.0
    %1534 = vmatpush2.msra.mxu0 0.0
    %1535 = vmatprep.subr.mxu0 0.0
    %1536 = vmatpush2.msra.mxu0 0.0
    %1537 = vmatprep.subr.mxu0 0.0
    %1538 = vmatpush2.msra.mxu0 0.0
    %1539 = vmatprep.subr.mxu0 0.0
    %1540 = vmatpush2.msra.mxu0 0.0
    %1541 = vmatprep.subr.mxu0 0.0
    %1542 = vmatpush2.msra.mxu0 0.0
    %1543 = vmatprep.subr.mxu0 0.0
    %1544 = vmatpush2.msra.mxu0 0.0
    %1545 = vmatprep.subr.mxu0 0.0
    %1546 = vmatpush2.msra.mxu0 0.0
    %1547 = vmatprep.subr.mxu0 0.0
    %1548 = vmatpush2.msra.mxu0 0.0
    %1549 = vmatprep.subr.mxu0 0.0
    %1550 = vmatpush2.msra.mxu0 0.0
    %1551 = vmatprep.subr.mxu0 0.0
    %1552 = vmatpush2.msra.mxu0 0.0
    %1553 = vmatprep.subr.mxu0 0.0
    %1554 = vmatpush2.msra.mxu0 0.0
    %1555 = vmatprep.subr.mxu0 0.0
    %1556 = vmatpush2.msra.mxu0 0.0
    %1557 = vmatprep.subr.mxu0 0.0
    %1558 = vmatpush2.msra.mxu0 0.0
    %1559 = vmatprep.subr.mxu0 0.0
    %1560 = vmatpush2.msra.mxu0 0.0
    %1561 = vmatprep.subr.mxu0 0.0
    %1562 = vmatpush2.msra.mxu0 0.0
    %1563 = vmatprep.mubr.f32.mxu0 0.0
    %1564 = vmatmul.mubr.f32.gmra.mxu0 %v1497
    %v1565 = vpop.f32.mrf.mxu0
    %v1566 = vadd.f32 0.0, %v1565
    %v1567 = vpop.f32.mrf.mxu0
    %1568 = vdwg.mxu0
    %v1570 = vsel %vm402, %v1485, 0
    %1572 = vmatprep.subr.mxu0 0.0
    %1573 = vmatpush1.msra.mxu0 0.0
    %1574 = vmatprep.subr.mxu0 0.0
    %1575 = vmatpush1.msra.mxu0 0.0
    %1576 = vmatprep.subr.mxu0 0.0
    %1577 = vmatpush1.msra.mxu0 0.0
    %1578 = vmatprep.subr.mxu0 0.0
    %1579 = vmatpush1.msra.mxu0 0.0
    %1580 = vmatprep.subr.mxu0 0.0
    %1581 = vmatpush1.msra.mxu0 0.0
    %1582 = vmatprep.subr.mxu0 0.0
    %1583 = vmatpush1.msra.mxu0 0.0
    %1584 = vmatprep.subr.mxu0 0.0
    %1585 = vmatpush1.msra.mxu0 0.0
    %1586 = vmatprep.subr.mxu0 0.0
    %1587 = vmatpush1.msra.mxu0 0.0
    %1588 = vmatprep.subr.mxu0 0.0
    %1589 = vmatpush1.msra.mxu0 0.0
    %1590 = vmatprep.subr.mxu0 0.0
    %1591 = vmatpush1.msra.mxu0 0.0
    %1592 = vmatprep.subr.mxu0 0.0
    %1593 = vmatpush1.msra.mxu0 0.0
    %1594 = vmatprep.subr.mxu0 0.0
    %1595 = vmatpush1.msra.mxu0 0.0
    %1596 = vmatprep.subr.mxu0 0.0
    %1597 = vmatpush1.msra.mxu0 %v1489
    %1598 = vmatprep.subr.mxu0 0.0
    %1599 = vmatpush1.msra.mxu0 %v1488
    %1600 = vmatprep.subr.mxu0 0.0
    %1601 = vmatpush1.msra.mxu0 %v1487
    %1602 = vmatprep.subr.mxu0 0.0
    %1603 = vmatpush1.msra.mxu0 %v1486
    %1604 = vmatprep.subr.mxu0 0.0
    %1605 = vmatpush2.msra.mxu0 0.0
    %1606 = vmatprep.subr.mxu0 0.0
    %1607 = vmatpush2.msra.mxu0 0.0
    %1608 = vmatprep.subr.mxu0 0.0
    %1609 = vmatpush2.msra.mxu0 0.0
    %1610 = vmatprep.subr.mxu0 0.0
    %1611 = vmatpush2.msra.mxu0 0.0
    %1612 = vmatprep.subr.mxu0 0.0
    %1613 = vmatpush2.msra.mxu0 0.0
    %1614 = vmatprep.subr.mxu0 0.0
    %1615 = vmatpush2.msra.mxu0 0.0
    %1616 = vmatprep.subr.mxu0 0.0
    %1617 = vmatpush2.msra.mxu0 0.0
    %1618 = vmatprep.subr.mxu0 0.0
    %1619 = vmatpush2.msra.mxu0 0.0
    %1620 = vmatprep.subr.mxu0 0.0
    %1621 = vmatpush2.msra.mxu0 0.0
    %1622 = vmatprep.subr.mxu0 0.0
    %1623 = vmatpush2.msra.mxu0 0.0
    %1624 = vmatprep.subr.mxu0 0.0
    %1625 = vmatpush2.msra.mxu0 0.0
    %1626 = vmatprep.subr.mxu0 0.0
    %1627 = vmatpush2.msra.mxu0 0.0
    %1628 = vmatprep.subr.mxu0 0.0
    %1629 = vmatpush2.msra.mxu0 0.0
    %1630 = vmatprep.subr.mxu0 0.0
    %1631 = vmatpush2.msra.mxu0 0.0
    %1632 = vmatprep.subr.mxu0 0.0
    %1633 = vmatpush2.msra.mxu0 0.0
    %1634 = vmatprep.subr.mxu0 0.0
    %1635 = vmatpush2.msra.mxu0 0.0
    %1636 = vmatprep.mubr.f32.mxu0 0.0
    %1637 = vmatmul.mubr.f32.gmra.mxu0 %v1570
    %v1638 = vpop.f32.mrf.mxu0
    %v1639 = vadd.f32 %v1566, %v1638
    %v1640 = vpop.f32.mrf.mxu0
    %1641 = vdwg.mxu0
    %s1642 = scalar_lea.vmem [#allocation4], 2
    %v1643 = vld [vmem:[%s1642] ss:$2 sm:$0x1f]
    %v1644 = vld [vmem:[%s10 + $0x40] sm:$0xff]
    %v1645 = vld [vmem:[%s10 + $0x48] sm:$0xff]
    %v1646 = vld [vmem:[%s10 + $0x50] sm:$0xff]
    %v1647 = vld [vmem:[%s10 + $0x58] sm:$0xff]
    %v1649 = vsel %vm402, %v1643, 0
    %1651 = vmatprep.subr.mxu0 0.0
    %1652 = vmatpush1.msra.mxu0 0.0
    %1653 = vmatprep.subr.mxu0 0.0
    %1654 = vmatpush1.msra.mxu0 0.0
    %1655 = vmatprep.subr.mxu0 0.0
    %1656 = vmatpush1.msra.mxu0 0.0
    %1657 = vmatprep.subr.mxu0 0.0
    %1658 = vmatpush1.msra.mxu0 0.0
    %1659 = vmatprep.subr.mxu0 0.0
    %1660 = vmatpush1.msra.mxu0 0.0
    %1661 = vmatprep.subr.mxu0 0.0
    %1662 = vmatpush1.msra.mxu0 0.0
    %1663 = vmatprep.subr.mxu0 0.0
    %1664 = vmatpush1.msra.mxu0 0.0
    %1665 = vmatprep.subr.mxu0 0.0
    %1666 = vmatpush1.msra.mxu0 0.0
    %1667 = vmatprep.subr.mxu0 0.0
    %1668 = vmatpush1.msra.mxu0 0.0
    %1669 = vmatprep.subr.mxu0 0.0
    %1670 = vmatpush1.msra.mxu0 0.0
    %1671 = vmatprep.subr.mxu0 0.0
    %1672 = vmatpush1.msra.mxu0 0.0
    %1673 = vmatprep.subr.mxu0 0.0
    %1674 = vmatpush1.msra.mxu0 0.0
    %1675 = vmatprep.subr.mxu0 0.0
    %1676 = vmatpush1.msra.mxu0 %v1647
    %1677 = vmatprep.subr.mxu0 0.0
    %1678 = vmatpush1.msra.mxu0 %v1646
    %1679 = vmatprep.subr.mxu0 0.0
    %1680 = vmatpush1.msra.mxu0 %v1645
    %1681 = vmatprep.subr.mxu0 0.0
    %1682 = vmatpush1.msra.mxu0 %v1644
    %1683 = vmatprep.subr.mxu0 0.0
    %1684 = vmatpush2.msra.mxu0 0.0
    %1685 = vmatprep.subr.mxu0 0.0
    %1686 = vmatpush2.msra.mxu0 0.0
    %1687 = vmatprep.subr.mxu0 0.0
    %1688 = vmatpush2.msra.mxu0 0.0
    %1689 = vmatprep.subr.mxu0 0.0
    %1690 = vmatpush2.msra.mxu0 0.0
    %1691 = vmatprep.subr.mxu0 0.0
    %1692 = vmatpush2.msra.mxu0 0.0
    %1693 = vmatprep.subr.mxu0 0.0
    %1694 = vmatpush2.msra.mxu0 0.0
    %1695 = vmatprep.subr.mxu0 0.0
    %1696 = vmatpush2.msra.mxu0 0.0
    %1697 = vmatprep.subr.mxu0 0.0
    %1698 = vmatpush2.msra.mxu0 0.0
    %1699 = vmatprep.subr.mxu0 0.0
    %1700 = vmatpush2.msra.mxu0 0.0
    %1701 = vmatprep.subr.mxu0 0.0
    %1702 = vmatpush2.msra.mxu0 0.0
    %1703 = vmatprep.subr.mxu0 0.0
    %1704 = vmatpush2.msra.mxu0 0.0
    %1705 = vmatprep.subr.mxu0 0.0
    %1706 = vmatpush2.msra.mxu0 0.0
    %1707 = vmatprep.subr.mxu0 0.0
    %1708 = vmatpush2.msra.mxu0 0.0
    %1709 = vmatprep.subr.mxu0 0.0
    %1710 = vmatpush2.msra.mxu0 0.0
    %1711 = vmatprep.subr.mxu0 0.0
    %1712 = vmatpush2.msra.mxu0 0.0
    %1713 = vmatprep.subr.mxu0 0.0
    %1714 = vmatpush2.msra.mxu0 0.0
    %1715 = vmatprep.mubr.f32.mxu0 0.0
    %1716 = vmatmul.mubr.f32.gmra.mxu0 %v1649
    %v1717 = vpop.f32.mrf.mxu0
    %v1718 = vadd.f32 0.0, %v1717
    %v1719 = vpop.f32.mrf.mxu0
    %1720 = vdwg.mxu0
    %v1721 = vadd.f32 %v1639, %v1718
    %s1722 = scalar_lea.vmem [#allocation4], 3
    %v1723 = vld [vmem:[%s1722] ss:$2 sm:$0x1f]
    %v1724 = vld [vmem:[%s10 + $0x60] sm:$0xff]
    %v1725 = vld [vmem:[%s10 + $0x68] sm:$0xff]
    %v1726 = vld [vmem:[%s10 + $0x70] sm:$0xff]
    %v1727 = vld [vmem:[%s10 + $0x78] sm:$0xff]
    %v1729 = vsel %vm402, %v1723, 0
    %1731 = vmatprep.subr.mxu0 0.0
    %1732 = vmatpush1.msra.mxu0 0.0
    %1733 = vmatprep.subr.mxu0 0.0
    %1734 = vmatpush1.msra.mxu0 0.0
    %1735 = vmatprep.subr.mxu0 0.0
    %1736 = vmatpush1.msra.mxu0 0.0
    %1737 = vmatprep.subr.mxu0 0.0
    %1738 = vmatpush1.msra.mxu0 0.0
    %1739 = vmatprep.subr.mxu0 0.0
    %1740 = vmatpush1.msra.mxu0 0.0
    %1741 = vmatprep.subr.mxu0 0.0
    %1742 = vmatpush1.msra.mxu0 0.0
    %1743 = vmatprep.subr.mxu0 0.0
    %1744 = vmatpush1.msra.mxu0 0.0
    %1745 = vmatprep.subr.mxu0 0.0
    %1746 = vmatpush1.msra.mxu0 0.0
    %1747 = vmatprep.subr.mxu0 0.0
    %1748 = vmatpush1.msra.mxu0 0.0
    %1749 = vmatprep.subr.mxu0 0.0
    %1750 = vmatpush1.msra.mxu0 0.0
    %1751 = vmatprep.subr.mxu0 0.0
    %1752 = vmatpush1.msra.mxu0 0.0
    %1753 = vmatprep.subr.mxu0 0.0
    %1754 = vmatpush1.msra.mxu0 0.0
    %1755 = vmatprep.subr.mxu0 0.0
    %1756 = vmatpush1.msra.mxu0 %v1727
    %1757 = vmatprep.subr.mxu0 0.0
    %1758 = vmatpush1.msra.mxu0 %v1726
    %1759 = vmatprep.subr.mxu0 0.0
    %1760 = vmatpush1.msra.mxu0 %v1725
    %1761 = vmatprep.subr.mxu0 0.0
    %1762 = vmatpush1.msra.mxu0 %v1724
    %1763 = vmatprep.subr.mxu0 0.0
    %1764 = vmatpush2.msra.mxu0 0.0
    %1765 = vmatprep.subr.mxu0 0.0
    %1766 = vmatpush2.msra.mxu0 0.0
    %1767 = vmatprep.subr.mxu0 0.0
    %1768 = vmatpush2.msra.mxu0 0.0
    %1769 = vmatprep.subr.mxu0 0.0
    %1770 = vmatpush2.msra.mxu0 0.0
    %1771 = vmatprep.subr.mxu0 0.0
    %1772 = vmatpush2.msra.mxu0 0.0
    %1773 = vmatprep.subr.mxu0 0.0
    %1774 = vmatpush2.msra.mxu0 0.0
    %1775 = vmatprep.subr.mxu0 0.0
    %1776 = vmatpush2.msra.mxu0 0.0
    %1777 = vmatprep.subr.mxu0 0.0
    %1778 = vmatpush2.msra.mxu0 0.0
    %1779 = vmatprep.subr.mxu0 0.0
    %1780 = vmatpush2.msra.mxu0 0.0
    %1781 = vmatprep.subr.mxu0 0.0
    %1782 = vmatpush2.msra.mxu0 0.0
    %1783 = vmatprep.subr.mxu0 0.0
    %1784 = vmatpush2.msra.mxu0 0.0
    %1785 = vmatprep.subr.mxu0 0.0
    %1786 = vmatpush2.msra.mxu0 0.0
    %1787 = vmatprep.subr.mxu0 0.0
    %1788 = vmatpush2.msra.mxu0 0.0
    %1789 = vmatprep.subr.mxu0 0.0
    %1790 = vmatpush2.msra.mxu0 0.0
    %1791 = vmatprep.subr.mxu0 0.0
    %1792 = vmatpush2.msra.mxu0 0.0
    %1793 = vmatprep.subr.mxu0 0.0
    %1794 = vmatpush2.msra.mxu0 0.0
    %1795 = vmatprep.mubr.f32.mxu0 0.0
    %1796 = vmatmul.mubr.f32.gmra.mxu0 %v1729
    %v1797 = vpop.f32.mrf.mxu0
    %v1798 = vadd.f32 0.0, %v1797
    %v1799 = vpop.f32.mrf.mxu0
    %1800 = vdwg.mxu0
    %v1801 = vadd.f32 %v1721, %v1798
    %v1802 = vld [vmem:[%s11] sm:$0x1]
    %v1803 = vld [vmem:[%s12] sm:$0x1]
    %v1804 = vsel %vm524, %v1801, 0.0
    %v1805 = vrot.slane %v1804, 4
    %v1806 = vadd.f32 %v1804, %v1805
    %v1807 = vrot.slane %v1806, 2
    %v1808 = vadd.f32 %v1806, %v1807
    %v1809 = vrot.slane %v1808, 1
    %v1810 = vadd.f32 %v1808, %v1809
    %v1811 = vadd.f32 %v1810, 0.0
    %v1813 = vrot.slane %v1801, 3
    %v1815 = vsel %vm524, %v1813, 0.0
    %v1816 = vrot.slane %v1815, 4
    %v1817 = vadd.f32 %v1815, %v1816
    %v1818 = vrot.slane %v1817, 2
    %v1819 = vadd.f32 %v1817, %v1818
    %v1820 = vrot.slane %v1819, 1
    %v1821 = vadd.f32 %v1819, %v1820
    %v1822 = vadd.f32 %v1811, %v1821
    %v1823 = vrcp.pop 4.0
    %v1824 = vmul.f32 %v1822, %v1823
    %v1825 = vsub.f32 %v1801, %v1824
    %v1826 = vmul.f32 %v1825, %v1825
    %v1827 = vsel %vm524, %v1826, 0.0
    %v1828 = vrot.slane %v1827, 4
    %v1829 = vadd.f32 %v1827, %v1828
    %v1830 = vrot.slane %v1829, 2
    %v1831 = vadd.f32 %v1829, %v1830
    %v1832 = vrot.slane %v1831, 1
    %v1833 = vadd.f32 %v1831, %v1832
    %v1834 = vadd.f32 %v1833, 0.0
    %v1836 = vrot.slane %v1826, 3
    %v1838 = vsel %vm524, %v1836, 0.0
    %v1839 = vrot.slane %v1838, 4
    %v1840 = vadd.f32 %v1838, %v1839
    %v1841 = vrot.slane %v1840, 2
    %v1842 = vadd.f32 %v1840, %v1841
    %v1843 = vrot.slane %v1842, 1
    %v1844 = vadd.f32 %v1842, %v1843
    %v1845 = vadd.f32 %v1834, %v1844
    %v1846 = vmul.f32 %v1845, %v1823
    %v1847 = vadd.f32 %v1846, 1e-05
    %v1848 = vrsqrt.pop %v1847
    %v1849 = vmul.f32 %v1802, %v1848
    %v1850 = vmul.f32 %v1824, %v1849
    %v1851 = vsub.f32 %v1803, %v1850
    %v1853 = vlaneseq
    %v1854 = vshrl.u32 %v1853, 7
    %v1855 = vsub.s32 0, %v1854
    %v1856 = vrot.slane %v1849, %v1855
    %v1858 = vmul.f32 %v1801, %v1856
    %v1860 = vlaneseq
    %v1861 = vshrl.u32 %v1860, 7
    %v1862 = vsub.s32 0, %v1861
    %v1863 = vrot.slane %v1851, %v1862
    %v1865 = vadd.f32 %v1858, %v1863
    %1866 = vrot.lane.b32.xlu0 %v1801, 96
    %v1867 = vpop.permute.xlu0 %1866
    %v1869 = vadd.f32 %v1865, %v1867
    %vm1870 = vcmp.ge.f32.partialorder %v1869, 0.0
    %v1871 = vmul.f32 %v1869, 0.2
    %v1872 = vsel %vm1870, %v1869, %v1871
    %1873 = vst.msk [vmem:[#allocation5] sm:$0x3] %vm524, %v1872
    %vm1874 = vcmask 258051
    %1875 = vst.msk [vmem:[#allocation5 - $0x1] sm:$0x18] %vm1874, %v1872
    // Predicated region
    $region54: #{tpu_custom_call.1} parent=1 // pred_check
      _
    $region55: #{tpu_custom_call.1} parent=1 // pred_check_branch
      %1877 = sbr.rel (0) target = $region57
    $region56: #{tpu_custom_call.1} parent=1 // pred_region
      %s1879 = ssub.s32 64, 64
      %1880 = vsyncadd [#allocation6], %s1879
      %s1882 = sshll.u32 [#allocation5], 4
      %s1883 = int_to_ptr.vmem [resolvable:$true] %s1882
      %1885 = dma.vmem_to_hbm [thread:$0]  %s1883, 64, %s13, [#allocation6]
    $region57: #{tpu_custom_call.1} parent=1 // pred_fallthru
      _
    // Predicated region
    $region58: #{tpu_custom_call.1} parent=1 // pred_check
      _
    $region59: #{tpu_custom_call.1} parent=1 // pred_check_branch
      %1887 = sbr.rel (0) target = $region61
    $region60: #{tpu_custom_call.1} parent=1 // pred_region
      %1888 = dma.done [#allocation6], 64
    $region61: #{tpu_custom_call.1} parent=1 // pred_fallthru
      _
    %1889 = vsyncpa [#allocation6], 1

</llo_original>
